<compile_context>
chip_gen: v5e
topology: v5e:2x2
jax: 0.10.0
libtpu: 0.0.40
codegen_flags: <defaults>
</compile_context>

<pallas_src>
import functools

import jax
import jax.numpy as jnp
import numpy as np
from jax import lax
from jax.experimental import pallas as pl
from jax.experimental.pallas import tpu as pltpu


# ---------------------------------------------------------------------------
# Fused kernel: conv3x3+BN+ReLU6 -> dw3x3+BN+ReLU6 -> pw1x1+BN [+res]
# All tensors are lane-dense (C, H*W) tiles; shifts via pltpu.roll + edge masks.
# ---------------------------------------------------------------------------
def _fused_preproc_kernel(x_ref, mask_ref, w1_ref, b1_ref, wdw_ref, b2_ref,
                          wpw_ref, b3_ref, o_ref, *, W, HW, Cin, Cmid, Cout,
                          use_res):
    f32 = jnp.float32
    x = x_ref[0].astype(f32)                                    # (Cin, HW)

    def shifted(v, ky, kx):
        # v[:, p] -> v[:, p + (ky-1)*W + (kx-1)] with zeros where the 3x3 tap
        # falls outside the image (edge masks precomputed host-side).
        d = (ky - 1) * W + (kx - 1)
        t = ky * 3 + kx
        if d == 0:                                              # centre tap: mask is all ones
            return v
        return pltpu.roll(v, shift=(-d) % HW, axis=1) * mask_ref[t:t + 1, :]

    # -- stage 1: conv3x3 (BN scale folded into w1) + bias + ReLU6 ----------
    y = jnp.zeros((Cmid, HW), f32)
    for ky in range(3):
        for kx in range(3):
            xt = shifted(x, ky, kx)                             # (Cin, HW), 1 roll per tap
            for ci in range(Cin):
                j = (ky * 3 + kx) * Cin + ci
                y = y + w1_ref[:, j:j + 1] * xt[ci:ci + 1, :]   # (Cmid,1)x(1,HW) VPU MAC
    y = jnp.clip(y + b1_ref[...], 0.0, 6.0)                     # (Cmid, HW)

    # -- stage 2: depthwise 3x3 (BN scale folded into wdw) + bias + ReLU6 ---
    z = jnp.zeros((Cmid, HW), f32)
    for ky in range(3):
        for kx in range(3):
            t = ky * 3 + kx
            z = z + wdw_ref[:, t:t + 1] * shifted(y, ky, kx)
    z = jnp.clip(z + b2_ref[...], 0.0, 6.0)                     # (Cmid, HW)

    # -- stage 3: pointwise 1x1 (BN scale folded into wpw) + bias [+ res] ---
    out = jnp.zeros((Cout, HW), f32)
    for c in range(Cmid):
        out = out + wpw_ref[:, c:c + 1] * z[c:c + 1, :]
    out = out + b3_ref[...]
    if use_res:                        # MBConv residual (IR stride==1 and Cmid==Cout)
        out = out + y
    o_ref[0] = out.astype(o_ref.dtype)                          # full-width, unmasked store


def preprocessing_forward(params, x_nchw, stride):
    if stride != 1:
        raise NotImplementedError("fused kernel supports stride == 1 only")

    N, Cin, H, W = x_nchw.shape
    K = 3
    Ho, Wo = H, W
    HW = H * W

    w1 = params["w1"]                      # (Cmid, Cin, 3, 3)  -- torch OIHW
    s1, b1 = params["bn1"]
    wdw = params["wdw"]                    # (Cmid, 3, 3)
    s2, b2 = params["bn2"]
    wpw = params["wpw"]                    # (Cout, Cmid)
    s3, b3 = params["bn3"]

    Cmid = w1.shape[0]
    Cout = wpw.shape[0]
    use_res = (Cmid == Cout)               # MBConv internal stride is always 1

    # Fold inference-mode BN scale into the weights (tiny host-side ops).
    w1f = jnp.transpose(w1 * s1[:, None, None, None], (0, 2, 3, 1))   # (Cmid,3,3,Cin)
    w1f = w1f.reshape(Cmid, K * K * Cin).astype(jnp.float32)
    wdwf = (wdw * s2[:, None, None]).reshape(Cmid, K * K).astype(jnp.float32)
    wpwf = (wpw * s3[:, None]).astype(jnp.float32)

    # Edge masks for the 9 taps of a 3x3 / pad-1 window in the flattened (H*W,) layout.
    masks = np.ones((K * K, H, W), np.float32)
    for ky in range(K):
        for kx in range(K):
            t = ky * K + kx
            if ky == 0:
                masks[t, 0, :] = 0.0
            if ky == 2:
                masks[t, H - 1, :] = 0.0
            if kx == 0:
                masks[t, :, 0] = 0.0
            if kx == 2:
                masks[t, :, W - 1] = 0.0
    masks = jnp.asarray(masks.reshape(K * K, HW))

    # Lane-dense I/O: flatten spatial dims (free, row-major reshape); no jnp.pad/transpose.
    x_flat = x_nchw.reshape(N, Cin, HW)

    kernel = functools.partial(
        _fused_preproc_kernel, W=W, HW=HW, Cin=Cin, Cmid=Cmid, Cout=Cout,
        use_res=use_res)

    out_flat = pl.pallas_call(
        kernel,
        out_shape=jax.ShapeDtypeStruct((N, Cout, HW), x_nchw.dtype),
        grid=(N,),
        in_specs=[
            pl.BlockSpec((1, Cin, HW), lambda n: (n, 0, 0)),          # lane-dense input
            pl.BlockSpec((K * K, HW), lambda n: (0, 0)),              # edge masks
            pl.BlockSpec((Cmid, K * K * Cin), lambda n: (0, 0)),      # folded conv weights
            pl.BlockSpec((Cmid, 1), lambda n: (0, 0)),                # bias 1
            pl.BlockSpec((Cmid, K * K), lambda n: (0, 0)),            # folded dw weights
            pl.BlockSpec((Cmid, 1), lambda n: (0, 0)),                # bias 2
            pl.BlockSpec((Cout, Cmid), lambda n: (0, 0)),             # folded pw weights
            pl.BlockSpec((Cout, 1), lambda n: (0, 0)),                # bias 3
        ],
        out_specs=pl.BlockSpec((1, Cout, HW), lambda n: (n, 0, 0)),   # lane-dense output
        compiler_params=pltpu.CompilerParams(
            dimension_semantics=("parallel",)),                       # batch -> both TCs
    )(x_flat, masks, w1f,
      b1.reshape(Cmid, 1).astype(jnp.float32), wdwf,
      b2.reshape(Cmid, 1).astype(jnp.float32), wpwf,
      b3.reshape(Cout, 1).astype(jnp.float32))

    return out_flat.reshape(N, Cout, Ho, Wo)


# ---------------------------------------------------------------------------
# Parameter setup
# ---------------------------------------------------------------------------
def _bn_params(key, c, eps=1e-5):
    k1, k2, k3, k4 = jax.random.split(key, 4)
    gamma = jax.random.uniform(k1, (c,), jnp.float32, 0.5, 1.5)
    beta = 0.1 * jax.random.normal(k2, (c,), jnp.float32)
    mean = 0.1 * jax.random.normal(k3, (c,), jnp.float32)
    var = jax.random.uniform(k4, (c,), jnp.float32, 0.5, 1.5)
    scale = gamma / jnp.sqrt(var + eps)
    bias = beta - mean * scale
    return scale, bias


def init_preprocessing_params(key, inp, oup, width_mult=1.0):
    mb_out = int(24 * width_mult)
    k = jax.random.split(key, 6)
    return {
        "w1": 0.1 * jax.random.normal(k[0], (oup, inp, 3, 3), jnp.float32),
        "bn1": _bn_params(k[1], oup),
        "wdw": 0.1 * jax.random.normal(k[2], (oup, 3, 3), jnp.float32),
        "bn2": _bn_params(k[3], oup),
        "wpw": 0.1 * jax.random.normal(k[4], (mb_out, oup), jnp.float32),
        "bn3": _bn_params(k[5], mb_out),
    }


# ---------------------------------------------------------------------------
# Pure-JAX reference (for correctness checking)
# ---------------------------------------------------------------------------
def preprocessing_reference(params, x_nchw, stride):
    x = jnp.transpose(x_nchw, (0, 2, 3, 1)).astype(jnp.float32)     # NHWC
    w1 = params["w1"]
    s1, b1 = params["bn1"]
    wdw = params["wdw"]
    s2, b2 = params["bn2"]
    wpw = params["wpw"]
    s3, b3 = params["bn3"]
    Cmid, Cout = w1.shape[0], wpw.shape[0]

    w1_hwio = jnp.transpose(w1, (2, 3, 1, 0))                        # (3,3,Cin,Cmid)
    y = lax.conv_general_dilated(x, w1_hwio, (stride, stride), ((1, 1), (1, 1)),
                                 dimension_numbers=("NHWC", "HWIO", "NHWC"))
    y = jnp.clip(y * s1 + b1, 0.0, 6.0)

    wdw_hwio = jnp.transpose(wdw, (1, 2, 0))[:, :, None, :]          # (3,3,1,Cmid)
    z = lax.conv_general_dilated(y, wdw_hwio, (1, 1), ((1, 1), (1, 1)),
                                 dimension_numbers=("NHWC", "HWIO", "NHWC"),
                                 feature_group_count=Cmid)
    z = jnp.clip(z * s2 + b2, 0.0, 6.0)

    o = jnp.einsum("nhwc,oc->nhwo", z, wpw)
    o = o * s3 + b3
    if Cmid == Cout:
        o = o + y
    return jnp.transpose(o, (0, 3, 1, 2))


if __name__ == "__main__":
    # PreProcessing(inp=4, oup=8, stride=1, width_mult=1.0)
    inp, oup, stride = 4, 8, 1
    key = jax.random.PRNGKey(0)
    kx_, kp = jax.random.split(key)

    x = jax.random.normal(kx_, (2, inp, 16, 16), jnp.float32)        # NCHW, like PyTorch
    params = init_preprocessing_params(kp, inp, oup)

    out = jax.block_until_ready(preprocessing_forward(params, x, stride))
    ref = jax.block_until_ready(preprocessing_reference(params, x, stride))

    assert out.shape == (2, 24, 16, 16), out.shape
    np.testing.assert_allclose(np.asarray(out), np.asarray(ref), rtol=1e-4, atol=1e-4)

    print("KERNEL_OK")
</pallas_src>

<mosaic_0001>
module attributes {stable_mosaic.version = 11 : i64} {
  func.func @_fused_preproc_kernel(%arg0: i32, %arg1: memref<1x4x256xf32, #tpu.memory_space<vmem>>, %arg2: memref<9x256xf32, #tpu.memory_space<vmem>>, %arg3: memref<8x36xf32, #tpu.memory_space<vmem>>, %arg4: memref<8x1xf32, #tpu.memory_space<vmem>>, %arg5: memref<8x9xf32, #tpu.memory_space<vmem>>, %arg6: memref<8x1xf32, #tpu.memory_space<vmem>>, %arg7: memref<24x8xf32, #tpu.memory_space<vmem>>, %arg8: memref<24x1xf32, #tpu.memory_space<vmem>>, %arg9: memref<1x24x256xf32, #tpu.memory_space<vmem>>) attributes {dimension_semantics = [#tpu.dimension_semantics<parallel>], iteration_bounds = array<i64: 2>, scalar_prefetch = 0 : i64, scratch_operands = 0 : i64, tpu.core_type = #tpu.core_type<tc>, window_params = [{transform_indices = @transform_0, window_bounds = array<i64: 1, 4, 256>}, {pipeline_mode = #tpu.pipeline_mode<synchronous>, transform_indices = @transform_1, window_bounds = array<i64: 9, 256>}, {pipeline_mode = #tpu.pipeline_mode<synchronous>, transform_indices = @transform_2, window_bounds = array<i64: 8, 36>}, {pipeline_mode = #tpu.pipeline_mode<synchronous>, transform_indices = @transform_3, window_bounds = array<i64: 8, 1>}, {pipeline_mode = #tpu.pipeline_mode<synchronous>, transform_indices = @transform_4, window_bounds = array<i64: 8, 9>}, {pipeline_mode = #tpu.pipeline_mode<synchronous>, transform_indices = @transform_5, window_bounds = array<i64: 8, 1>}, {pipeline_mode = #tpu.pipeline_mode<synchronous>, transform_indices = @transform_6, window_bounds = array<i64: 24, 8>}, {pipeline_mode = #tpu.pipeline_mode<synchronous>, transform_indices = @transform_7, window_bounds = array<i64: 24, 1>}, {transform_indices = @transform_8, window_bounds = array<i64: 1, 24, 256>}]} {
    %c0 = arith.constant 0 : index
    %c0_0 = arith.constant 0 : index
    %c0_1 = arith.constant 0 : index
    %0 = vector.load %arg1[%c0, %c0_0, %c0_1] : memref<1x4x256xf32, #tpu.memory_space<vmem>>, vector<1x4x256xf32>
    %1 = vector.shape_cast %0 : vector<1x4x256xf32> to vector<4x256xf32>
    %cst = arith.constant 0.000000e+00 : f32
    %2 = vector.broadcast %cst : f32 to vector<8x256xf32>
    %c17_i32 = arith.constant 17 : i32
    %3 = tpu.dynamic_rotate %1 by %c17_i32 dim 1 : vector<4x256xf32>, i32 -> vector<4x256xf32>
    %c0_2 = arith.constant 0 : index
    %c0_3 = arith.constant 0 : index
    %4 = vector.load %arg2[%c0_2, %c0_3] : memref<9x256xf32, #tpu.memory_space<vmem>>, vector<1x256xf32>
    %5 = vector.broadcast %4 : vector<1x256xf32> to vector<4x256xf32>
    %6 = arith.mulf %3, %5 : vector<4x256xf32>
    %c0_4 = arith.constant 0 : index
    %c0_5 = arith.constant 0 : index
    %7 = vector.load %arg3[%c0_4, %c0_5] : memref<8x36xf32, #tpu.memory_space<vmem>>, vector<8x1xf32>
    %8 = vector.extract_strided_slice %6 {offsets = [0, 0], sizes = [1, 256], strides = [1, 1]} : vector<4x256xf32> to vector<1x256xf32>
    %9 = vector.broadcast %7 : vector<8x1xf32> to vector<8x256xf32>
    %10 = vector.broadcast %8 : vector<1x256xf32> to vector<8x256xf32>
    %11 = arith.mulf %9, %10 : vector<8x256xf32>
    %12 = arith.addf %2, %11 : vector<8x256xf32>
    %c0_6 = arith.constant 0 : index
    %c1 = arith.constant 1 : index
    %13 = vector.load %arg3[%c0_6, %c1] : memref<8x36xf32, #tpu.memory_space<vmem>>, vector<8x1xf32>
    %14 = vector.extract_strided_slice %6 {offsets = [1, 0], sizes = [1, 256], strides = [1, 1]} : vector<4x256xf32> to vector<1x256xf32>
    %15 = vector.broadcast %13 : vector<8x1xf32> to vector<8x256xf32>
    %16 = vector.broadcast %14 : vector<1x256xf32> to vector<8x256xf32>
    %17 = arith.mulf %15, %16 : vector<8x256xf32>
    %18 = arith.addf %12, %17 : vector<8x256xf32>
    %c0_7 = arith.constant 0 : index
    %c2 = arith.constant 2 : index
    %19 = vector.load %arg3[%c0_7, %c2] : memref<8x36xf32, #tpu.memory_space<vmem>>, vector<8x1xf32>
    %20 = vector.extract_strided_slice %6 {offsets = [2, 0], sizes = [1, 256], strides = [1, 1]} : vector<4x256xf32> to vector<1x256xf32>
    %21 = vector.broadcast %19 : vector<8x1xf32> to vector<8x256xf32>
    %22 = vector.broadcast %20 : vector<1x256xf32> to vector<8x256xf32>
    %23 = arith.mulf %21, %22 : vector<8x256xf32>
    %24 = arith.addf %18, %23 : vector<8x256xf32>
    %c0_8 = arith.constant 0 : index
    %c3 = arith.constant 3 : index
    %25 = vector.load %arg3[%c0_8, %c3] : memref<8x36xf32, #tpu.memory_space<vmem>>, vector<8x1xf32>
    %26 = vector.extract_strided_slice %6 {offsets = [3, 0], sizes = [1, 256], strides = [1, 1]} : vector<4x256xf32> to vector<1x256xf32>
    %27 = vector.broadcast %25 : vector<8x1xf32> to vector<8x256xf32>
    %28 = vector.broadcast %26 : vector<1x256xf32> to vector<8x256xf32>
    %29 = arith.mulf %27, %28 : vector<8x256xf32>
    %30 = arith.addf %24, %29 : vector<8x256xf32>
    %c16_i32 = arith.constant 16 : i32
    %31 = tpu.dynamic_rotate %1 by %c16_i32 dim 1 : vector<4x256xf32>, i32 -> vector<4x256xf32>
    %c1_9 = arith.constant 1 : index
    %c0_10 = arith.constant 0 : index
    %32 = vector.load %arg2[%c1_9, %c0_10] : memref<9x256xf32, #tpu.memory_space<vmem>>, vector<1x256xf32>
    %33 = vector.broadcast %32 : vector<1x256xf32> to vector<4x256xf32>
    %34 = arith.mulf %31, %33 : vector<4x256xf32>
    %c0_11 = arith.constant 0 : index
    %c4 = arith.constant 4 : index
    %35 = vector.load %arg3[%c0_11, %c4] : memref<8x36xf32, #tpu.memory_space<vmem>>, vector<8x1xf32>
    %36 = vector.extract_strided_slice %34 {offsets = [0, 0], sizes = [1, 256], strides = [1, 1]} : vector<4x256xf32> to vector<1x256xf32>
    %37 = vector.broadcast %35 : vector<8x1xf32> to vector<8x256xf32>
    %38 = vector.broadcast %36 : vector<1x256xf32> to vector<8x256xf32>
    %39 = arith.mulf %37, %38 : vector<8x256xf32>
    %40 = arith.addf %30, %39 : vector<8x256xf32>
    %c0_12 = arith.constant 0 : index
    %c5 = arith.constant 5 : index
    %41 = vector.load %arg3[%c0_12, %c5] : memref<8x36xf32, #tpu.memory_space<vmem>>, vector<8x1xf32>
    %42 = vector.extract_strided_slice %34 {offsets = [1, 0], sizes = [1, 256], strides = [1, 1]} : vector<4x256xf32> to vector<1x256xf32>
    %43 = vector.broadcast %41 : vector<8x1xf32> to vector<8x256xf32>
    %44 = vector.broadcast %42 : vector<1x256xf32> to vector<8x256xf32>
    %45 = arith.mulf %43, %44 : vector<8x256xf32>
    %46 = arith.addf %40, %45 : vector<8x256xf32>
    %c0_13 = arith.constant 0 : index
    %c6 = arith.constant 6 : index
    %47 = vector.load %arg3[%c0_13, %c6] : memref<8x36xf32, #tpu.memory_space<vmem>>, vector<8x1xf32>
    %48 = vector.extract_strided_slice %34 {offsets = [2, 0], sizes = [1, 256], strides = [1, 1]} : vector<4x256xf32> to vector<1x256xf32>
    %49 = vector.broadcast %47 : vector<8x1xf32> to vector<8x256xf32>
    %50 = vector.broadcast %48 : vector<1x256xf32> to vector<8x256xf32>
    %51 = arith.mulf %49, %50 : vector<8x256xf32>
    %52 = arith.addf %46, %51 : vector<8x256xf32>
    %c0_14 = arith.constant 0 : index
    %c7 = arith.constant 7 : index
    %53 = vector.load %arg3[%c0_14, %c7] : memref<8x36xf32, #tpu.memory_space<vmem>>, vector<8x1xf32>
    %54 = vector.extract_strided_slice %34 {offsets = [3, 0], sizes = [1, 256], strides = [1, 1]} : vector<4x256xf32> to vector<1x256xf32>
    %55 = vector.broadcast %53 : vector<8x1xf32> to vector<8x256xf32>
    %56 = vector.broadcast %54 : vector<1x256xf32> to vector<8x256xf32>
    %57 = arith.mulf %55, %56 : vector<8x256xf32>
    %58 = arith.addf %52, %57 : vector<8x256xf32>
    %c15_i32 = arith.constant 15 : i32
    %59 = tpu.dynamic_rotate %1 by %c15_i32 dim 1 : vector<4x256xf32>, i32 -> vector<4x256xf32>
    %c2_15 = arith.constant 2 : index
    %c0_16 = arith.constant 0 : index
    %60 = vector.load %arg2[%c2_15, %c0_16] : memref<9x256xf32, #tpu.memory_space<vmem>>, vector<1x256xf32>
    %61 = vector.broadcast %60 : vector<1x256xf32> to vector<4x256xf32>
    %62 = arith.mulf %59, %61 : vector<4x256xf32>
    %c0_17 = arith.constant 0 : index
    %c8 = arith.constant 8 : index
    %63 = vector.load %arg3[%c0_17, %c8] : memref<8x36xf32, #tpu.memory_space<vmem>>, vector<8x1xf32>
    %64 = vector.extract_strided_slice %62 {offsets = [0, 0], sizes = [1, 256], strides = [1, 1]} : vector<4x256xf32> to vector<1x256xf32>
    %65 = vector.broadcast %63 : vector<8x1xf32> to vector<8x256xf32>
    %66 = vector.broadcast %64 : vector<1x256xf32> to vector<8x256xf32>
    %67 = arith.mulf %65, %66 : vector<8x256xf32>
    %68 = arith.addf %58, %67 : vector<8x256xf32>
    %c0_18 = arith.constant 0 : index
    %c9 = arith.constant 9 : index
    %69 = vector.load %arg3[%c0_18, %c9] : memref<8x36xf32, #tpu.memory_space<vmem>>, vector<8x1xf32>
    %70 = vector.extract_strided_slice %62 {offsets = [1, 0], sizes = [1, 256], strides = [1, 1]} : vector<4x256xf32> to vector<1x256xf32>
    %71 = vector.broadcast %69 : vector<8x1xf32> to vector<8x256xf32>
    %72 = vector.broadcast %70 : vector<1x256xf32> to vector<8x256xf32>
    %73 = arith.mulf %71, %72 : vector<8x256xf32>
    %74 = arith.addf %68, %73 : vector<8x256xf32>
    %c0_19 = arith.constant 0 : index
    %c10 = arith.constant 10 : index
    %75 = vector.load %arg3[%c0_19, %c10] : memref<8x36xf32, #tpu.memory_space<vmem>>, vector<8x1xf32>
    %76 = vector.extract_strided_slice %62 {offsets = [2, 0], sizes = [1, 256], strides = [1, 1]} : vector<4x256xf32> to vector<1x256xf32>
    %77 = vector.broadcast %75 : vector<8x1xf32> to vector<8x256xf32>
    %78 = vector.broadcast %76 : vector<1x256xf32> to vector<8x256xf32>
    %79 = arith.mulf %77, %78 : vector<8x256xf32>
    %80 = arith.addf %74, %79 : vector<8x256xf32>
    %c0_20 = arith.constant 0 : index
    %c11 = arith.constant 11 : index
    %81 = vector.load %arg3[%c0_20, %c11] : memref<8x36xf32, #tpu.memory_space<vmem>>, vector<8x1xf32>
    %82 = vector.extract_strided_slice %62 {offsets = [3, 0], sizes = [1, 256], strides = [1, 1]} : vector<4x256xf32> to vector<1x256xf32>
    %83 = vector.broadcast %81 : vector<8x1xf32> to vector<8x256xf32>
    %84 = vector.broadcast %82 : vector<1x256xf32> to vector<8x256xf32>
    %85 = arith.mulf %83, %84 : vector<8x256xf32>
    %86 = arith.addf %80, %85 : vector<8x256xf32>
    %c1_i32 = arith.constant 1 : i32
    %87 = tpu.dynamic_rotate %1 by %c1_i32 dim 1 : vector<4x256xf32>, i32 -> vector<4x256xf32>
    %c3_21 = arith.constant 3 : index
    %c0_22 = arith.constant 0 : index
    %88 = vector.load %arg2[%c3_21, %c0_22] : memref<9x256xf32, #tpu.memory_space<vmem>>, vector<1x256xf32>
    %89 = vector.broadcast %88 : vector<1x256xf32> to vector<4x256xf32>
    %90 = arith.mulf %87, %89 : vector<4x256xf32>
    %c0_23 = arith.constant 0 : index
    %c12 = arith.constant 12 : index
    %91 = vector.load %arg3[%c0_23, %c12] : memref<8x36xf32, #tpu.memory_space<vmem>>, vector<8x1xf32>
    %92 = vector.extract_strided_slice %90 {offsets = [0, 0], sizes = [1, 256], strides = [1, 1]} : vector<4x256xf32> to vector<1x256xf32>
    %93 = vector.broadcast %91 : vector<8x1xf32> to vector<8x256xf32>
    %94 = vector.broadcast %92 : vector<1x256xf32> to vector<8x256xf32>
    %95 = arith.mulf %93, %94 : vector<8x256xf32>
    %96 = arith.addf %86, %95 : vector<8x256xf32>
    %c0_24 = arith.constant 0 : index
    %c13 = arith.constant 13 : index
    %97 = vector.load %arg3[%c0_24, %c13] : memref<8x36xf32, #tpu.memory_space<vmem>>, vector<8x1xf32>
    %98 = vector.extract_strided_slice %90 {offsets = [1, 0], sizes = [1, 256], strides = [1, 1]} : vector<4x256xf32> to vector<1x256xf32>
    %99 = vector.broadcast %97 : vector<8x1xf32> to vector<8x256xf32>
    %100 = vector.broadcast %98 : vector<1x256xf32> to vector<8x256xf32>
    %101 = arith.mulf %99, %100 : vector<8x256xf32>
    %102 = arith.addf %96, %101 : vector<8x256xf32>
    %c0_25 = arith.constant 0 : index
    %c14 = arith.constant 14 : index
    %103 = vector.load %arg3[%c0_25, %c14] : memref<8x36xf32, #tpu.memory_space<vmem>>, vector<8x1xf32>
    %104 = vector.extract_strided_slice %90 {offsets = [2, 0], sizes = [1, 256], strides = [1, 1]} : vector<4x256xf32> to vector<1x256xf32>
    %105 = vector.broadcast %103 : vector<8x1xf32> to vector<8x256xf32>
    %106 = vector.broadcast %104 : vector<1x256xf32> to vector<8x256xf32>
    %107 = arith.mulf %105, %106 : vector<8x256xf32>
    %108 = arith.addf %102, %107 : vector<8x256xf32>
    %c0_26 = arith.constant 0 : index
    %c15 = arith.constant 15 : index
    %109 = vector.load %arg3[%c0_26, %c15] : memref<8x36xf32, #tpu.memory_space<vmem>>, vector<8x1xf32>
    %110 = vector.extract_strided_slice %90 {offsets = [3, 0], sizes = [1, 256], strides = [1, 1]} : vector<4x256xf32> to vector<1x256xf32>
    %111 = vector.broadcast %109 : vector<8x1xf32> to vector<8x256xf32>
    %112 = vector.broadcast %110 : vector<1x256xf32> to vector<8x256xf32>
    %113 = arith.mulf %111, %112 : vector<8x256xf32>
    %114 = arith.addf %108, %113 : vector<8x256xf32>
    %c0_27 = arith.constant 0 : index
    %c16 = arith.constant 16 : index
    %115 = vector.load %arg3[%c0_27, %c16] : memref<8x36xf32, #tpu.memory_space<vmem>>, vector<8x1xf32>
    %116 = vector.extract_strided_slice %1 {offsets = [0, 0], sizes = [1, 256], strides = [1, 1]} : vector<4x256xf32> to vector<1x256xf32>
    %117 = vector.broadcast %115 : vector<8x1xf32> to vector<8x256xf32>
    %118 = vector.broadcast %116 : vector<1x256xf32> to vector<8x256xf32>
    %119 = arith.mulf %117, %118 : vector<8x256xf32>
    %120 = arith.addf %114, %119 : vector<8x256xf32>
    %c0_28 = arith.constant 0 : index
    %c17 = arith.constant 17 : index
    %121 = vector.load %arg3[%c0_28, %c17] : memref<8x36xf32, #tpu.memory_space<vmem>>, vector<8x1xf32>
    %122 = vector.extract_strided_slice %1 {offsets = [1, 0], sizes = [1, 256], strides = [1, 1]} : vector<4x256xf32> to vector<1x256xf32>
    %123 = vector.broadcast %121 : vector<8x1xf32> to vector<8x256xf32>
    %124 = vector.broadcast %122 : vector<1x256xf32> to vector<8x256xf32>
    %125 = arith.mulf %123, %124 : vector<8x256xf32>
    %126 = arith.addf %120, %125 : vector<8x256xf32>
    %c0_29 = arith.constant 0 : index
    %c18 = arith.constant 18 : index
    %127 = vector.load %arg3[%c0_29, %c18] : memref<8x36xf32, #tpu.memory_space<vmem>>, vector<8x1xf32>
    %128 = vector.extract_strided_slice %1 {offsets = [2, 0], sizes = [1, 256], strides = [1, 1]} : vector<4x256xf32> to vector<1x256xf32>
    %129 = vector.broadcast %127 : vector<8x1xf32> to vector<8x256xf32>
    %130 = vector.broadcast %128 : vector<1x256xf32> to vector<8x256xf32>
    %131 = arith.mulf %129, %130 : vector<8x256xf32>
    %132 = arith.addf %126, %131 : vector<8x256xf32>
    %c0_30 = arith.constant 0 : index
    %c19 = arith.constant 19 : index
    %133 = vector.load %arg3[%c0_30, %c19] : memref<8x36xf32, #tpu.memory_space<vmem>>, vector<8x1xf32>
    %134 = vector.extract_strided_slice %1 {offsets = [3, 0], sizes = [1, 256], strides = [1, 1]} : vector<4x256xf32> to vector<1x256xf32>
    %135 = vector.broadcast %133 : vector<8x1xf32> to vector<8x256xf32>
    %136 = vector.broadcast %134 : vector<1x256xf32> to vector<8x256xf32>
    %137 = arith.mulf %135, %136 : vector<8x256xf32>
    %138 = arith.addf %132, %137 : vector<8x256xf32>
    %c255_i32 = arith.constant 255 : i32
    %139 = tpu.dynamic_rotate %1 by %c255_i32 dim 1 : vector<4x256xf32>, i32 -> vector<4x256xf32>
    %c5_31 = arith.constant 5 : index
    %c0_32 = arith.constant 0 : index
    %140 = vector.load %arg2[%c5_31, %c0_32] : memref<9x256xf32, #tpu.memory_space<vmem>>, vector<1x256xf32>
    %141 = vector.broadcast %140 : vector<1x256xf32> to vector<4x256xf32>
    %142 = arith.mulf %139, %141 : vector<4x256xf32>
    %c0_33 = arith.constant 0 : index
    %c20 = arith.constant 20 : index
    %143 = vector.load %arg3[%c0_33, %c20] : memref<8x36xf32, #tpu.memory_space<vmem>>, vector<8x1xf32>
    %144 = vector.extract_strided_slice %142 {offsets = [0, 0], sizes = [1, 256], strides = [1, 1]} : vector<4x256xf32> to vector<1x256xf32>
    %145 = vector.broadcast %143 : vector<8x1xf32> to vector<8x256xf32>
    %146 = vector.broadcast %144 : vector<1x256xf32> to vector<8x256xf32>
    %147 = arith.mulf %145, %146 : vector<8x256xf32>
    %148 = arith.addf %138, %147 : vector<8x256xf32>
    %c0_34 = arith.constant 0 : index
    %c21 = arith.constant 21 : index
    %149 = vector.load %arg3[%c0_34, %c21] : memref<8x36xf32, #tpu.memory_space<vmem>>, vector<8x1xf32>
    %150 = vector.extract_strided_slice %142 {offsets = [1, 0], sizes = [1, 256], strides = [1, 1]} : vector<4x256xf32> to vector<1x256xf32>
    %151 = vector.broadcast %149 : vector<8x1xf32> to vector<8x256xf32>
    %152 = vector.broadcast %150 : vector<1x256xf32> to vector<8x256xf32>
    %153 = arith.mulf %151, %152 : vector<8x256xf32>
    %154 = arith.addf %148, %153 : vector<8x256xf32>
    %c0_35 = arith.constant 0 : index
    %c22 = arith.constant 22 : index
    %155 = vector.load %arg3[%c0_35, %c22] : memref<8x36xf32, #tpu.memory_space<vmem>>, vector<8x1xf32>
    %156 = vector.extract_strided_slice %142 {offsets = [2, 0], sizes = [1, 256], strides = [1, 1]} : vector<4x256xf32> to vector<1x256xf32>
    %157 = vector.broadcast %155 : vector<8x1xf32> to vector<8x256xf32>
    %158 = vector.broadcast %156 : vector<1x256xf32> to vector<8x256xf32>
    %159 = arith.mulf %157, %158 : vector<8x256xf32>
    %160 = arith.addf %154, %159 : vector<8x256xf32>
    %c0_36 = arith.constant 0 : index
    %c23 = arith.constant 23 : index
    %161 = vector.load %arg3[%c0_36, %c23] : memref<8x36xf32, #tpu.memory_space<vmem>>, vector<8x1xf32>
    %162 = vector.extract_strided_slice %142 {offsets = [3, 0], sizes = [1, 256], strides = [1, 1]} : vector<4x256xf32> to vector<1x256xf32>
    %163 = vector.broadcast %161 : vector<8x1xf32> to vector<8x256xf32>
    %164 = vector.broadcast %162 : vector<1x256xf32> to vector<8x256xf32>
    %165 = arith.mulf %163, %164 : vector<8x256xf32>
    %166 = arith.addf %160, %165 : vector<8x256xf32>
    %c241_i32 = arith.constant 241 : i32
    %167 = tpu.dynamic_rotate %1 by %c241_i32 dim 1 : vector<4x256xf32>, i32 -> vector<4x256xf32>
    %c6_37 = arith.constant 6 : index
    %c0_38 = arith.constant 0 : index
    %168 = vector.load %arg2[%c6_37, %c0_38] : memref<9x256xf32, #tpu.memory_space<vmem>>, vector<1x256xf32>
    %169 = vector.broadcast %168 : vector<1x256xf32> to vector<4x256xf32>
    %170 = arith.mulf %167, %169 : vector<4x256xf32>
    %c0_39 = arith.constant 0 : index
    %c24 = arith.constant 24 : index
    %171 = vector.load %arg3[%c0_39, %c24] : memref<8x36xf32, #tpu.memory_space<vmem>>, vector<8x1xf32>
    %172 = vector.extract_strided_slice %170 {offsets = [0, 0], sizes = [1, 256], strides = [1, 1]} : vector<4x256xf32> to vector<1x256xf32>
    %173 = vector.broadcast %171 : vector<8x1xf32> to vector<8x256xf32>
    %174 = vector.broadcast %172 : vector<1x256xf32> to vector<8x256xf32>
    %175 = arith.mulf %173, %174 : vector<8x256xf32>
    %176 = arith.addf %166, %175 : vector<8x256xf32>
    %c0_40 = arith.constant 0 : index
    %c25 = arith.constant 25 : index
    %177 = vector.load %arg3[%c0_40, %c25] : memref<8x36xf32, #tpu.memory_space<vmem>>, vector<8x1xf32>
    %178 = vector.extract_strided_slice %170 {offsets = [1, 0], sizes = [1, 256], strides = [1, 1]} : vector<4x256xf32> to vector<1x256xf32>
    %179 = vector.broadcast %177 : vector<8x1xf32> to vector<8x256xf32>
    %180 = vector.broadcast %178 : vector<1x256xf32> to vector<8x256xf32>
    %181 = arith.mulf %179, %180 : vector<8x256xf32>
    %182 = arith.addf %176, %181 : vector<8x256xf32>
    %c0_41 = arith.constant 0 : index
    %c26 = arith.constant 26 : index
    %183 = vector.load %arg3[%c0_41, %c26] : memref<8x36xf32, #tpu.memory_space<vmem>>, vector<8x1xf32>
    %184 = vector.extract_strided_slice %170 {offsets = [2, 0], sizes = [1, 256], strides = [1, 1]} : vector<4x256xf32> to vector<1x256xf32>
    %185 = vector.broadcast %183 : vector<8x1xf32> to vector<8x256xf32>
    %186 = vector.broadcast %184 : vector<1x256xf32> to vector<8x256xf32>
    %187 = arith.mulf %185, %186 : vector<8x256xf32>
    %188 = arith.addf %182, %187 : vector<8x256xf32>
    %c0_42 = arith.constant 0 : index
    %c27 = arith.constant 27 : index
    %189 = vector.load %arg3[%c0_42, %c27] : memref<8x36xf32, #tpu.memory_space<vmem>>, vector<8x1xf32>
    %190 = vector.extract_strided_slice %170 {offsets = [3, 0], sizes = [1, 256], strides = [1, 1]} : vector<4x256xf32> to vector<1x256xf32>
    %191 = vector.broadcast %189 : vector<8x1xf32> to vector<8x256xf32>
    %192 = vector.broadcast %190 : vector<1x256xf32> to vector<8x256xf32>
    %193 = arith.mulf %191, %192 : vector<8x256xf32>
    %194 = arith.addf %188, %193 : vector<8x256xf32>
    %c240_i32 = arith.constant 240 : i32
    %195 = tpu.dynamic_rotate %1 by %c240_i32 dim 1 : vector<4x256xf32>, i32 -> vector<4x256xf32>
    %c7_43 = arith.constant 7 : index
    %c0_44 = arith.constant 0 : index
    %196 = vector.load %arg2[%c7_43, %c0_44] : memref<9x256xf32, #tpu.memory_space<vmem>>, vector<1x256xf32>
    %197 = vector.broadcast %196 : vector<1x256xf32> to vector<4x256xf32>
    %198 = arith.mulf %195, %197 : vector<4x256xf32>
    %c0_45 = arith.constant 0 : index
    %c28 = arith.constant 28 : index
    %199 = vector.load %arg3[%c0_45, %c28] : memref<8x36xf32, #tpu.memory_space<vmem>>, vector<8x1xf32>
    %200 = vector.extract_strided_slice %198 {offsets = [0, 0], sizes = [1, 256], strides = [1, 1]} : vector<4x256xf32> to vector<1x256xf32>
    %201 = vector.broadcast %199 : vector<8x1xf32> to vector<8x256xf32>
    %202 = vector.broadcast %200 : vector<1x256xf32> to vector<8x256xf32>
    %203 = arith.mulf %201, %202 : vector<8x256xf32>
    %204 = arith.addf %194, %203 : vector<8x256xf32>
    %c0_46 = arith.constant 0 : index
    %c29 = arith.constant 29 : index
    %205 = vector.load %arg3[%c0_46, %c29] : memref<8x36xf32, #tpu.memory_space<vmem>>, vector<8x1xf32>
    %206 = vector.extract_strided_slice %198 {offsets = [1, 0], sizes = [1, 256], strides = [1, 1]} : vector<4x256xf32> to vector<1x256xf32>
    %207 = vector.broadcast %205 : vector<8x1xf32> to vector<8x256xf32>
    %208 = vector.broadcast %206 : vector<1x256xf32> to vector<8x256xf32>
    %209 = arith.mulf %207, %208 : vector<8x256xf32>
    %210 = arith.addf %204, %209 : vector<8x256xf32>
    %c0_47 = arith.constant 0 : index
    %c30 = arith.constant 30 : index
    %211 = vector.load %arg3[%c0_47, %c30] : memref<8x36xf32, #tpu.memory_space<vmem>>, vector<8x1xf32>
    %212 = vector.extract_strided_slice %198 {offsets = [2, 0], sizes = [1, 256], strides = [1, 1]} : vector<4x256xf32> to vector<1x256xf32>
    %213 = vector.broadcast %211 : vector<8x1xf32> to vector<8x256xf32>
    %214 = vector.broadcast %212 : vector<1x256xf32> to vector<8x256xf32>
    %215 = arith.mulf %213, %214 : vector<8x256xf32>
    %216 = arith.addf %210, %215 : vector<8x256xf32>
    %c0_48 = arith.constant 0 : index
    %c31 = arith.constant 31 : index
    %217 = vector.load %arg3[%c0_48, %c31] : memref<8x36xf32, #tpu.memory_space<vmem>>, vector<8x1xf32>
    %218 = vector.extract_strided_slice %198 {offsets = [3, 0], sizes = [1, 256], strides = [1, 1]} : vector<4x256xf32> to vector<1x256xf32>
    %219 = vector.broadcast %217 : vector<8x1xf32> to vector<8x256xf32>
    %220 = vector.broadcast %218 : vector<1x256xf32> to vector<8x256xf32>
    %221 = arith.mulf %219, %220 : vector<8x256xf32>
    %222 = arith.addf %216, %221 : vector<8x256xf32>
    %c239_i32 = arith.constant 239 : i32
    %223 = tpu.dynamic_rotate %1 by %c239_i32 dim 1 : vector<4x256xf32>, i32 -> vector<4x256xf32>
    %c8_49 = arith.constant 8 : index
    %c0_50 = arith.constant 0 : index
    %224 = vector.load %arg2[%c8_49, %c0_50] : memref<9x256xf32, #tpu.memory_space<vmem>>, vector<1x256xf32>
    %225 = vector.broadcast %224 : vector<1x256xf32> to vector<4x256xf32>
    %226 = arith.mulf %223, %225 : vector<4x256xf32>
    %c0_51 = arith.constant 0 : index
    %c32 = arith.constant 32 : index
    %227 = vector.load %arg3[%c0_51, %c32] : memref<8x36xf32, #tpu.memory_space<vmem>>, vector<8x1xf32>
    %228 = vector.extract_strided_slice %226 {offsets = [0, 0], sizes = [1, 256], strides = [1, 1]} : vector<4x256xf32> to vector<1x256xf32>
    %229 = vector.broadcast %227 : vector<8x1xf32> to vector<8x256xf32>
    %230 = vector.broadcast %228 : vector<1x256xf32> to vector<8x256xf32>
    %231 = arith.mulf %229, %230 : vector<8x256xf32>
    %232 = arith.addf %222, %231 : vector<8x256xf32>
    %c0_52 = arith.constant 0 : index
    %c33 = arith.constant 33 : index
    %233 = vector.load %arg3[%c0_52, %c33] : memref<8x36xf32, #tpu.memory_space<vmem>>, vector<8x1xf32>
    %234 = vector.extract_strided_slice %226 {offsets = [1, 0], sizes = [1, 256], strides = [1, 1]} : vector<4x256xf32> to vector<1x256xf32>
    %235 = vector.broadcast %233 : vector<8x1xf32> to vector<8x256xf32>
    %236 = vector.broadcast %234 : vector<1x256xf32> to vector<8x256xf32>
    %237 = arith.mulf %235, %236 : vector<8x256xf32>
    %238 = arith.addf %232, %237 : vector<8x256xf32>
    %c0_53 = arith.constant 0 : index
    %c34 = arith.constant 34 : index
    %239 = vector.load %arg3[%c0_53, %c34] : memref<8x36xf32, #tpu.memory_space<vmem>>, vector<8x1xf32>
    %240 = vector.extract_strided_slice %226 {offsets = [2, 0], sizes = [1, 256], strides = [1, 1]} : vector<4x256xf32> to vector<1x256xf32>
    %241 = vector.broadcast %239 : vector<8x1xf32> to vector<8x256xf32>
    %242 = vector.broadcast %240 : vector<1x256xf32> to vector<8x256xf32>
    %243 = arith.mulf %241, %242 : vector<8x256xf32>
    %244 = arith.addf %238, %243 : vector<8x256xf32>
    %c0_54 = arith.constant 0 : index
    %c35 = arith.constant 35 : index
    %245 = vector.load %arg3[%c0_54, %c35] : memref<8x36xf32, #tpu.memory_space<vmem>>, vector<8x1xf32>
    %246 = vector.extract_strided_slice %226 {offsets = [3, 0], sizes = [1, 256], strides = [1, 1]} : vector<4x256xf32> to vector<1x256xf32>
    %247 = vector.broadcast %245 : vector<8x1xf32> to vector<8x256xf32>
    %248 = vector.broadcast %246 : vector<1x256xf32> to vector<8x256xf32>
    %249 = arith.mulf %247, %248 : vector<8x256xf32>
    %250 = arith.addf %244, %249 : vector<8x256xf32>
    %c0_55 = arith.constant 0 : index
    %c0_56 = arith.constant 0 : index
    %251 = vector.load %arg4[%c0_55, %c0_56] : memref<8x1xf32, #tpu.memory_space<vmem>>, vector<8x1xf32>
    %252 = vector.broadcast %251 : vector<8x1xf32> to vector<8x256xf32>
    %253 = arith.addf %250, %252 : vector<8x256xf32>
    %cst_57 = arith.constant 0.000000e+00 : f32
    %cst_58 = arith.constant 6.000000e+00 : f32
    %254 = vector.broadcast %cst_57 : f32 to vector<8x256xf32>
    %255 = arith.maximumf %254, %253 : vector<8x256xf32>
    %256 = vector.broadcast %cst_58 : f32 to vector<8x256xf32>
    %257 = arith.minimumf %256, %255 : vector<8x256xf32>
    %cst_59 = arith.constant 0.000000e+00 : f32
    %258 = vector.broadcast %cst_59 : f32 to vector<8x256xf32>
    %c0_60 = arith.constant 0 : index
    %c0_61 = arith.constant 0 : index
    %259 = vector.load %arg5[%c0_60, %c0_61] : memref<8x9xf32, #tpu.memory_space<vmem>>, vector<8x1xf32>
    %c17_i32_62 = arith.constant 17 : i32
    %260 = tpu.dynamic_rotate %257 by %c17_i32_62 dim 1 : vector<8x256xf32>, i32 -> vector<8x256xf32>
    %c0_63 = arith.constant 0 : index
    %c0_64 = arith.constant 0 : index
    %261 = vector.load %arg2[%c0_63, %c0_64] : memref<9x256xf32, #tpu.memory_space<vmem>>, vector<1x256xf32>
    %262 = vector.broadcast %261 : vector<1x256xf32> to vector<8x256xf32>
    %263 = arith.mulf %260, %262 : vector<8x256xf32>
    %264 = vector.broadcast %259 : vector<8x1xf32> to vector<8x256xf32>
    %265 = arith.mulf %264, %263 : vector<8x256xf32>
    %266 = arith.addf %258, %265 : vector<8x256xf32>
    %c0_65 = arith.constant 0 : index
    %c1_66 = arith.constant 1 : index
    %267 = vector.load %arg5[%c0_65, %c1_66] : memref<8x9xf32, #tpu.memory_space<vmem>>, vector<8x1xf32>
    %c16_i32_67 = arith.constant 16 : i32
    %268 = tpu.dynamic_rotate %257 by %c16_i32_67 dim 1 : vector<8x256xf32>, i32 -> vector<8x256xf32>
    %c1_68 = arith.constant 1 : index
    %c0_69 = arith.constant 0 : index
    %269 = vector.load %arg2[%c1_68, %c0_69] : memref<9x256xf32, #tpu.memory_space<vmem>>, vector<1x256xf32>
    %270 = vector.broadcast %269 : vector<1x256xf32> to vector<8x256xf32>
    %271 = arith.mulf %268, %270 : vector<8x256xf32>
    %272 = vector.broadcast %267 : vector<8x1xf32> to vector<8x256xf32>
    %273 = arith.mulf %272, %271 : vector<8x256xf32>
    %274 = arith.addf %266, %273 : vector<8x256xf32>
    %c0_70 = arith.constant 0 : index
    %c2_71 = arith.constant 2 : index
    %275 = vector.load %arg5[%c0_70, %c2_71] : memref<8x9xf32, #tpu.memory_space<vmem>>, vector<8x1xf32>
    %c15_i32_72 = arith.constant 15 : i32
    %276 = tpu.dynamic_rotate %257 by %c15_i32_72 dim 1 : vector<8x256xf32>, i32 -> vector<8x256xf32>
    %c2_73 = arith.constant 2 : index
    %c0_74 = arith.constant 0 : index
    %277 = vector.load %arg2[%c2_73, %c0_74] : memref<9x256xf32, #tpu.memory_space<vmem>>, vector<1x256xf32>
    %278 = vector.broadcast %277 : vector<1x256xf32> to vector<8x256xf32>
    %279 = arith.mulf %276, %278 : vector<8x256xf32>
    %280 = vector.broadcast %275 : vector<8x1xf32> to vector<8x256xf32>
    %281 = arith.mulf %280, %279 : vector<8x256xf32>
    %282 = arith.addf %274, %281 : vector<8x256xf32>
    %c0_75 = arith.constant 0 : index
    %c3_76 = arith.constant 3 : index
    %283 = vector.load %arg5[%c0_75, %c3_76] : memref<8x9xf32, #tpu.memory_space<vmem>>, vector<8x1xf32>
    %c1_i32_77 = arith.constant 1 : i32
    %284 = tpu.dynamic_rotate %257 by %c1_i32_77 dim 1 : vector<8x256xf32>, i32 -> vector<8x256xf32>
    %c3_78 = arith.constant 3 : index
    %c0_79 = arith.constant 0 : index
    %285 = vector.load %arg2[%c3_78, %c0_79] : memref<9x256xf32, #tpu.memory_space<vmem>>, vector<1x256xf32>
    %286 = vector.broadcast %285 : vector<1x256xf32> to vector<8x256xf32>
    %287 = arith.mulf %284, %286 : vector<8x256xf32>
    %288 = vector.broadcast %283 : vector<8x1xf32> to vector<8x256xf32>
    %289 = arith.mulf %288, %287 : vector<8x256xf32>
    %290 = arith.addf %282, %289 : vector<8x256xf32>
    %c0_80 = arith.constant 0 : index
    %c4_81 = arith.constant 4 : index
    %291 = vector.load %arg5[%c0_80, %c4_81] : memref<8x9xf32, #tpu.memory_space<vmem>>, vector<8x1xf32>
    %292 = vector.broadcast %291 : vector<8x1xf32> to vector<8x256xf32>
    %293 = arith.mulf %292, %257 : vector<8x256xf32>
    %294 = arith.addf %290, %293 : vector<8x256xf32>
    %c0_82 = arith.constant 0 : index
    %c5_83 = arith.constant 5 : index
    %295 = vector.load %arg5[%c0_82, %c5_83] : memref<8x9xf32, #tpu.memory_space<vmem>>, vector<8x1xf32>
    %c255_i32_84 = arith.constant 255 : i32
    %296 = tpu.dynamic_rotate %257 by %c255_i32_84 dim 1 : vector<8x256xf32>, i32 -> vector<8x256xf32>
    %c5_85 = arith.constant 5 : index
    %c0_86 = arith.constant 0 : index
    %297 = vector.load %arg2[%c5_85, %c0_86] : memref<9x256xf32, #tpu.memory_space<vmem>>, vector<1x256xf32>
    %298 = vector.broadcast %297 : vector<1x256xf32> to vector<8x256xf32>
    %299 = arith.mulf %296, %298 : vector<8x256xf32>
    %300 = vector.broadcast %295 : vector<8x1xf32> to vector<8x256xf32>
    %301 = arith.mulf %300, %299 : vector<8x256xf32>
    %302 = arith.addf %294, %301 : vector<8x256xf32>
    %c0_87 = arith.constant 0 : index
    %c6_88 = arith.constant 6 : index
    %303 = vector.load %arg5[%c0_87, %c6_88] : memref<8x9xf32, #tpu.memory_space<vmem>>, vector<8x1xf32>
    %c241_i32_89 = arith.constant 241 : i32
    %304 = tpu.dynamic_rotate %257 by %c241_i32_89 dim 1 : vector<8x256xf32>, i32 -> vector<8x256xf32>
    %c6_90 = arith.constant 6 : index
    %c0_91 = arith.constant 0 : index
    %305 = vector.load %arg2[%c6_90, %c0_91] : memref<9x256xf32, #tpu.memory_space<vmem>>, vector<1x256xf32>
    %306 = vector.broadcast %305 : vector<1x256xf32> to vector<8x256xf32>
    %307 = arith.mulf %304, %306 : vector<8x256xf32>
    %308 = vector.broadcast %303 : vector<8x1xf32> to vector<8x256xf32>
    %309 = arith.mulf %308, %307 : vector<8x256xf32>
    %310 = arith.addf %302, %309 : vector<8x256xf32>
    %c0_92 = arith.constant 0 : index
    %c7_93 = arith.constant 7 : index
    %311 = vector.load %arg5[%c0_92, %c7_93] : memref<8x9xf32, #tpu.memory_space<vmem>>, vector<8x1xf32>
    %c240_i32_94 = arith.constant 240 : i32
    %312 = tpu.dynamic_rotate %257 by %c240_i32_94 dim 1 : vector<8x256xf32>, i32 -> vector<8x256xf32>
    %c7_95 = arith.constant 7 : index
    %c0_96 = arith.constant 0 : index
    %313 = vector.load %arg2[%c7_95, %c0_96] : memref<9x256xf32, #tpu.memory_space<vmem>>, vector<1x256xf32>
    %314 = vector.broadcast %313 : vector<1x256xf32> to vector<8x256xf32>
    %315 = arith.mulf %312, %314 : vector<8x256xf32>
    %316 = vector.broadcast %311 : vector<8x1xf32> to vector<8x256xf32>
    %317 = arith.mulf %316, %315 : vector<8x256xf32>
    %318 = arith.addf %310, %317 : vector<8x256xf32>
    %c0_97 = arith.constant 0 : index
    %c8_98 = arith.constant 8 : index
    %319 = vector.load %arg5[%c0_97, %c8_98] : memref<8x9xf32, #tpu.memory_space<vmem>>, vector<8x1xf32>
    %c239_i32_99 = arith.constant 239 : i32
    %320 = tpu.dynamic_rotate %257 by %c239_i32_99 dim 1 : vector<8x256xf32>, i32 -> vector<8x256xf32>
    %c8_100 = arith.constant 8 : index
    %c0_101 = arith.constant 0 : index
    %321 = vector.load %arg2[%c8_100, %c0_101] : memref<9x256xf32, #tpu.memory_space<vmem>>, vector<1x256xf32>
    %322 = vector.broadcast %321 : vector<1x256xf32> to vector<8x256xf32>
    %323 = arith.mulf %320, %322 : vector<8x256xf32>
    %324 = vector.broadcast %319 : vector<8x1xf32> to vector<8x256xf32>
    %325 = arith.mulf %324, %323 : vector<8x256xf32>
    %326 = arith.addf %318, %325 : vector<8x256xf32>
    %c0_102 = arith.constant 0 : index
    %c0_103 = arith.constant 0 : index
    %327 = vector.load %arg6[%c0_102, %c0_103] : memref<8x1xf32, #tpu.memory_space<vmem>>, vector<8x1xf32>
    %328 = vector.broadcast %327 : vector<8x1xf32> to vector<8x256xf32>
    %329 = arith.addf %326, %328 : vector<8x256xf32>
    %cst_104 = arith.constant 0.000000e+00 : f32
    %cst_105 = arith.constant 6.000000e+00 : f32
    %330 = vector.broadcast %cst_104 : f32 to vector<8x256xf32>
    %331 = arith.maximumf %330, %329 : vector<8x256xf32>
    %332 = vector.broadcast %cst_105 : f32 to vector<8x256xf32>
    %333 = arith.minimumf %332, %331 : vector<8x256xf32>
    %cst_106 = arith.constant 0.000000e+00 : f32
    %334 = vector.broadcast %cst_106 : f32 to vector<24x256xf32>
    %c0_107 = arith.constant 0 : index
    %c0_108 = arith.constant 0 : index
    %335 = vector.load %arg7[%c0_107, %c0_108] : memref<24x8xf32, #tpu.memory_space<vmem>>, vector<24x1xf32>
    %336 = vector.extract_strided_slice %333 {offsets = [0, 0], sizes = [1, 256], strides = [1, 1]} : vector<8x256xf32> to vector<1x256xf32>
    %337 = vector.broadcast %335 : vector<24x1xf32> to vector<24x256xf32>
    %338 = vector.broadcast %336 : vector<1x256xf32> to vector<24x256xf32>
    %339 = arith.mulf %337, %338 : vector<24x256xf32>
    %340 = arith.addf %334, %339 : vector<24x256xf32>
    %c0_109 = arith.constant 0 : index
    %c1_110 = arith.constant 1 : index
    %341 = vector.load %arg7[%c0_109, %c1_110] : memref<24x8xf32, #tpu.memory_space<vmem>>, vector<24x1xf32>
    %342 = vector.extract_strided_slice %333 {offsets = [1, 0], sizes = [1, 256], strides = [1, 1]} : vector<8x256xf32> to vector<1x256xf32>
    %343 = vector.broadcast %341 : vector<24x1xf32> to vector<24x256xf32>
    %344 = vector.broadcast %342 : vector<1x256xf32> to vector<24x256xf32>
    %345 = arith.mulf %343, %344 : vector<24x256xf32>
    %346 = arith.addf %340, %345 : vector<24x256xf32>
    %c0_111 = arith.constant 0 : index
    %c2_112 = arith.constant 2 : index
    %347 = vector.load %arg7[%c0_111, %c2_112] : memref<24x8xf32, #tpu.memory_space<vmem>>, vector<24x1xf32>
    %348 = vector.extract_strided_slice %333 {offsets = [2, 0], sizes = [1, 256], strides = [1, 1]} : vector<8x256xf32> to vector<1x256xf32>
    %349 = vector.broadcast %347 : vector<24x1xf32> to vector<24x256xf32>
    %350 = vector.broadcast %348 : vector<1x256xf32> to vector<24x256xf32>
    %351 = arith.mulf %349, %350 : vector<24x256xf32>
    %352 = arith.addf %346, %351 : vector<24x256xf32>
    %c0_113 = arith.constant 0 : index
    %c3_114 = arith.constant 3 : index
    %353 = vector.load %arg7[%c0_113, %c3_114] : memref<24x8xf32, #tpu.memory_space<vmem>>, vector<24x1xf32>
    %354 = vector.extract_strided_slice %333 {offsets = [3, 0], sizes = [1, 256], strides = [1, 1]} : vector<8x256xf32> to vector<1x256xf32>
    %355 = vector.broadcast %353 : vector<24x1xf32> to vector<24x256xf32>
    %356 = vector.broadcast %354 : vector<1x256xf32> to vector<24x256xf32>
    %357 = arith.mulf %355, %356 : vector<24x256xf32>
    %358 = arith.addf %352, %357 : vector<24x256xf32>
    %c0_115 = arith.constant 0 : index
    %c4_116 = arith.constant 4 : index
    %359 = vector.load %arg7[%c0_115, %c4_116] : memref<24x8xf32, #tpu.memory_space<vmem>>, vector<24x1xf32>
    %360 = vector.extract_strided_slice %333 {offsets = [4, 0], sizes = [1, 256], strides = [1, 1]} : vector<8x256xf32> to vector<1x256xf32>
    %361 = vector.broadcast %359 : vector<24x1xf32> to vector<24x256xf32>
    %362 = vector.broadcast %360 : vector<1x256xf32> to vector<24x256xf32>
    %363 = arith.mulf %361, %362 : vector<24x256xf32>
    %364 = arith.addf %358, %363 : vector<24x256xf32>
    %c0_117 = arith.constant 0 : index
    %c5_118 = arith.constant 5 : index
    %365 = vector.load %arg7[%c0_117, %c5_118] : memref<24x8xf32, #tpu.memory_space<vmem>>, vector<24x1xf32>
    %366 = vector.extract_strided_slice %333 {offsets = [5, 0], sizes = [1, 256], strides = [1, 1]} : vector<8x256xf32> to vector<1x256xf32>
    %367 = vector.broadcast %365 : vector<24x1xf32> to vector<24x256xf32>
    %368 = vector.broadcast %366 : vector<1x256xf32> to vector<24x256xf32>
    %369 = arith.mulf %367, %368 : vector<24x256xf32>
    %370 = arith.addf %364, %369 : vector<24x256xf32>
    %c0_119 = arith.constant 0 : index
    %c6_120 = arith.constant 6 : index
    %371 = vector.load %arg7[%c0_119, %c6_120] : memref<24x8xf32, #tpu.memory_space<vmem>>, vector<24x1xf32>
    %372 = vector.extract_strided_slice %333 {offsets = [6, 0], sizes = [1, 256], strides = [1, 1]} : vector<8x256xf32> to vector<1x256xf32>
    %373 = vector.broadcast %371 : vector<24x1xf32> to vector<24x256xf32>
    %374 = vector.broadcast %372 : vector<1x256xf32> to vector<24x256xf32>
    %375 = arith.mulf %373, %374 : vector<24x256xf32>
    %376 = arith.addf %370, %375 : vector<24x256xf32>
    %c0_121 = arith.constant 0 : index
    %c7_122 = arith.constant 7 : index
    %377 = vector.load %arg7[%c0_121, %c7_122] : memref<24x8xf32, #tpu.memory_space<vmem>>, vector<24x1xf32>
    %378 = vector.extract_strided_slice %333 {offsets = [7, 0], sizes = [1, 256], strides = [1, 1]} : vector<8x256xf32> to vector<1x256xf32>
    %379 = vector.broadcast %377 : vector<24x1xf32> to vector<24x256xf32>
    %380 = vector.broadcast %378 : vector<1x256xf32> to vector<24x256xf32>
    %381 = arith.mulf %379, %380 : vector<24x256xf32>
    %382 = arith.addf %376, %381 : vector<24x256xf32>
    %c0_123 = arith.constant 0 : index
    %c0_124 = arith.constant 0 : index
    %383 = vector.load %arg8[%c0_123, %c0_124] : memref<24x1xf32, #tpu.memory_space<vmem>>, vector<24x1xf32>
    %384 = vector.broadcast %383 : vector<24x1xf32> to vector<24x256xf32>
    %385 = arith.addf %382, %384 : vector<24x256xf32>
    %c0_125 = arith.constant 0 : index
    %c0_126 = arith.constant 0 : index
    %c0_127 = arith.constant 0 : index
    %386 = vector.load %arg9[%c0_125, %c0_126, %c0_127] : memref<1x24x256xf32, #tpu.memory_space<vmem>>, vector<1x24x256xf32>
    %387 = vector.shape_cast %386 : vector<1x24x256xf32> to vector<24x256xf32>
    %388 = vector.shape_cast %385 : vector<24x256xf32> to vector<1x24x256xf32>
    tpu.vector_store %arg9[%c0_125, %c0_126, %c0_127], %388 {strides = array<i32>} : memref<1x24x256xf32, #tpu.memory_space<vmem>>, vector<1x24x256xf32>,
    return
  }
  func.func @transform_0(%arg0: i32) -> (i32, i32, i32) {
    %c0_i32 = arith.constant 0 : i32
    %c0_i32_0 = arith.constant 0 : i32
    %c0_i32_1 = arith.constant 0 : i32
    return %arg0, %c0_i32, %c0_i32_0 : i32, i32, i32
  }
  func.func @transform_1(%arg0: i32) -> (i32, i32) {
    %c0_i32 = arith.constant 0 : i32
    %c0_i32_0 = arith.constant 0 : i32
    %c0_i32_1 = arith.constant 0 : i32
    return %c0_i32, %c0_i32_0 : i32, i32
  }
  func.func @transform_2(%arg0: i32) -> (i32, i32) {
    %c0_i32 = arith.constant 0 : i32
    %c0_i32_0 = arith.constant 0 : i32
    %c0_i32_1 = arith.constant 0 : i32
    return %c0_i32, %c0_i32_0 : i32, i32
  }
  func.func @transform_3(%arg0: i32) -> (i32, i32) {
    %c0_i32 = arith.constant 0 : i32
    %c0_i32_0 = arith.constant 0 : i32
    %c0_i32_1 = arith.constant 0 : i32
    return %c0_i32, %c0_i32_0 : i32, i32
  }
  func.func @transform_4(%arg0: i32) -> (i32, i32) {
    %c0_i32 = arith.constant 0 : i32
    %c0_i32_0 = arith.constant 0 : i32
    %c0_i32_1 = arith.constant 0 : i32
    return %c0_i32, %c0_i32_0 : i32, i32
  }
  func.func @transform_5(%arg0: i32) -> (i32, i32) {
    %c0_i32 = arith.constant 0 : i32
    %c0_i32_0 = arith.constant 0 : i32
    %c0_i32_1 = arith.constant 0 : i32
    return %c0_i32, %c0_i32_0 : i32, i32
  }
  func.func @transform_6(%arg0: i32) -> (i32, i32) {
    %c0_i32 = arith.constant 0 : i32
    %c0_i32_0 = arith.constant 0 : i32
    %c0_i32_1 = arith.constant 0 : i32
    return %c0_i32, %c0_i32_0 : i32, i32
  }
  func.func @transform_7(%arg0: i32) -> (i32, i32) {
    %c0_i32 = arith.constant 0 : i32
    %c0_i32_0 = arith.constant 0 : i32
    %c0_i32_1 = arith.constant 0 : i32
    return %c0_i32, %c0_i32_0 : i32, i32
  }
  func.func @transform_8(%arg0: i32) -> (i32, i32, i32) {
    %c0_i32 = arith.constant 0 : i32
    %c0_i32_0 = arith.constant 0 : i32
    %c0_i32_1 = arith.constant 0 : i32
    return %arg0, %c0_i32, %c0_i32_0 : i32, i32, i32
  }
}

</mosaic_0001>

<llo_original>
// kernel: tpu_custom_call.1
$region0: #{tpu_custom_call.1}
  #allocation0 [shape = 'u32[]', space=smem, size = 0x4, offset = 0x4, fixed_abs, tag = 'smem constant byte address 0x4 - core index']
  #allocation1 [shape = 'u32[72,128]{1,0:T(1,128)}', space=vmem, size = 0x9000, scoped, tag = 'internal scratch']
  %s0 = inlined_call_operand.vmem [shape: f32[2,4,256], index: 0, kind: input, shape index: {}]
  %s1 = inlined_call_operand.vmem [shape: f32[9,256], index: 1, kind: input, shape index: {}]
  %s2 = inlined_call_operand.vmem [shape: f32[8,36], index: 2, kind: input, shape index: {}]
  %s3 = inlined_call_operand.vmem [shape: f32[8,1], index: 3, kind: input, shape index: {}]
  %s4 = inlined_call_operand.vmem [shape: f32[8,9], index: 4, kind: input, shape index: {}]
  %s5 = inlined_call_operand.vmem [shape: f32[8,1], index: 5, kind: input, shape index: {}]
  %s6 = inlined_call_operand.vmem [shape: f32[24,8], index: 6, kind: input, shape index: {}]
  %s7 = inlined_call_operand.vmem [shape: f32[24,1], index: 7, kind: input, shape index: {}]
  %s8 = inlined_call_operand.hbm [shape: f32[2,24,256], index: 8, kind: output, shape index: {}]
  %s9 = sld [smem:[#allocation0]]
  $region65: #{tpu_custom_call.1} parent=0
    _
  %s11 = ssub.s32 1, %s9
  %s12 = scalar_select 0, %s11, %s9
  $region1: #{tpu_custom_call.1} parent=0
    #allocation2 [shape = 'u8[49152]{0}', space=vmem, size = 0xc000, scoped, tag = 'output window, operand 0']
    #allocation3 [shape = 's32[2]{0}', space=sflag, size = 0x8, scoped, tag = 'scoped memory for tpu_custom_call.1']
    %13 = vsyncpa [#allocation3], 0
    %s14 = scalar_lea.sflag [#allocation3], 1
    %15 = vsyncpa %s14, 0
    loop: start=0, step=1, limit=4
    $region2: #{tpu_custom_call.1} parent=1 // loop_pre_header
      _
    $region3: #{tpu_custom_call.1} parent=1 // loop_header
      %s17 = sphi 0, %s21
      %p18 = scmp.ge.s32.totalorder %s17, 4
      %s27 = sphi 0, %s29
      %s30 = sphi 0, %s27
      %s31 = sphi 0, %s30
      %s47 = sphi 0, %s31
      %s51 = sphi 0, %s51
      %s53 = sphi 0, %s51
      %s54 = sphi 0, %s53
      %s68 = sphi 0, %s54
      %s72 = sphi 0, %s72
      %s74 = sphi 0, %s72
      %s75 = sphi 0, %s74
      %s89 = sphi 0, %s75
      %s93 = sphi 0, %s93
      %s95 = sphi 0, %s93
      %s96 = sphi 0, %s95
      %s110 = sphi 0, %s96
      %s114 = sphi 0, %s114
      %s116 = sphi 0, %s114
      %s117 = sphi 0, %s116
      %s131 = sphi 0, %s117
      %s135 = sphi 0, %s135
      %s137 = sphi 0, %s135
      %s138 = sphi 0, %s137
      %s152 = sphi 0, %s138
      %s156 = sphi 0, %s156
      %s158 = sphi 0, %s156
      %s159 = sphi 0, %s158
      %s173 = sphi 0, %s159
      %s177 = sphi 0, %s177
      %s179 = sphi 0, %s177
      %s180 = sphi 0, %s179
      %s194 = sphi 0, %s180
      %s200 = sphi 0, %s202
      %s203 = sphi 0, %s200
      %s204 = sphi 0, %s203
      %s220 = sphi 0, %s204
    $region4: #{tpu_custom_call.1} parent=1 // loop_header_branch
      %20 = sbr.rel (%p18) target = $region8
    $region5: #{tpu_custom_call.1} parent=1 // loop_body
      %s22 = ssub.s32 %s17, 1
      %s23 = ssub.s32 %s17, 2
      %s24 = sadd.s32 %s17, 1
      %s25 = ssub.s32 %s17, %s24
      %p26 = scmp.eq.s32.totalorder %s25, 0
      %s28 = sadd.s32 %s27, 1
      %s29 = scalar_select %p26, %s27, %s28
      %p32 = pneg %p26
      %p33 = scmp.eq.s32.totalorder %s17, 1
      %p34 = por %p32, %p33
      %p35 = scmp.ne.s32.totalorder %s27, %s30
      %p36 = scmp.eq.s32.totalorder %s17, 0
      %p37 = por %p35, %p36
      %p38 = scmp.ne.s32.totalorder %s27, %s30
      %p39 = scmp.eq.s32.totalorder %s22, 1
      %p40 = por %p38, %p39
      %p41 = scmp.ne.s32.totalorder %s30, %s31
      %p42 = scmp.eq.s32.totalorder %s22, 0
      %p43 = por %p41, %p42
      %p44 = scmp.ne.s32.totalorder %s30, %s31
      %p45 = scmp.eq.s32.totalorder %s23, 1
      %p46 = por %p44, %p45
      %p48 = scmp.ne.s32.totalorder %s31, %s47
      %p49 = scmp.eq.s32.totalorder %s23, 0
      %p50 = por %p48, %p49
      %s52 = sadd.s32 %s51, 1
      %p55 = scmp.eq.s32.totalorder %s17, 1
      %p56 = scmp.ne.s32.totalorder %s51, %s53
      %p57 = scmp.eq.s32.totalorder %s17, 0
      %p58 = por %p56, %p57
      %p59 = scmp.ne.s32.totalorder %s51, %s53
      %p60 = scmp.eq.s32.totalorder %s22, 1
      %p61 = por %p59, %p60
      %p62 = scmp.ne.s32.totalorder %s53, %s54
      %p63 = scmp.eq.s32.totalorder %s22, 0
      %p64 = por %p62, %p63
      %p65 = scmp.ne.s32.totalorder %s53, %s54
      %p66 = scmp.eq.s32.totalorder %s23, 1
      %p67 = por %p65, %p66
      %p69 = scmp.ne.s32.totalorder %s54, %s68
      %p70 = scmp.eq.s32.totalorder %s23, 0
      %p71 = por %p69, %p70
      %s73 = sadd.s32 %s72, 1
      %p76 = scmp.eq.s32.totalorder %s17, 1
      %p77 = scmp.ne.s32.totalorder %s72, %s74
      %p78 = scmp.eq.s32.totalorder %s17, 0
      %p79 = por %p77, %p78
      %p80 = scmp.ne.s32.totalorder %s72, %s74
      %p81 = scmp.eq.s32.totalorder %s22, 1
      %p82 = por %p80, %p81
      %p83 = scmp.ne.s32.totalorder %s74, %s75
      %p84 = scmp.eq.s32.totalorder %s22, 0
      %p85 = por %p83, %p84
      %p86 = scmp.ne.s32.totalorder %s74, %s75
      %p87 = scmp.eq.s32.totalorder %s23, 1
      %p88 = por %p86, %p87
      %p90 = scmp.ne.s32.totalorder %s75, %s89
      %p91 = scmp.eq.s32.totalorder %s23, 0
      %p92 = por %p90, %p91
      %s94 = sadd.s32 %s93, 1
      %p97 = scmp.eq.s32.totalorder %s17, 1
      %p98 = scmp.ne.s32.totalorder %s93, %s95
      %p99 = scmp.eq.s32.totalorder %s17, 0
      %p100 = por %p98, %p99
      %p101 = scmp.ne.s32.totalorder %s93, %s95
      %p102 = scmp.eq.s32.totalorder %s22, 1
      %p103 = por %p101, %p102
      %p104 = scmp.ne.s32.totalorder %s95, %s96
      %p105 = scmp.eq.s32.totalorder %s22, 0
      %p106 = por %p104, %p105
      %p107 = scmp.ne.s32.totalorder %s95, %s96
      %p108 = scmp.eq.s32.totalorder %s23, 1
      %p109 = por %p107, %p108
      %p111 = scmp.ne.s32.totalorder %s96, %s110
      %p112 = scmp.eq.s32.totalorder %s23, 0
      %p113 = por %p111, %p112
      %s115 = sadd.s32 %s114, 1
      %p118 = scmp.eq.s32.totalorder %s17, 1
      %p119 = scmp.ne.s32.totalorder %s114, %s116
      %p120 = scmp.eq.s32.totalorder %s17, 0
      %p121 = por %p119, %p120
      %p122 = scmp.ne.s32.totalorder %s114, %s116
      %p123 = scmp.eq.s32.totalorder %s22, 1
      %p124 = por %p122, %p123
      %p125 = scmp.ne.s32.totalorder %s116, %s117
      %p126 = scmp.eq.s32.totalorder %s22, 0
      %p127 = por %p125, %p126
      %p128 = scmp.ne.s32.totalorder %s116, %s117
      %p129 = scmp.eq.s32.totalorder %s23, 1
      %p130 = por %p128, %p129
      %p132 = scmp.ne.s32.totalorder %s117, %s131
      %p133 = scmp.eq.s32.totalorder %s23, 0
      %p134 = por %p132, %p133
      %s136 = sadd.s32 %s135, 1
      %p139 = scmp.eq.s32.totalorder %s17, 1
      %p140 = scmp.ne.s32.totalorder %s135, %s137
      %p141 = scmp.eq.s32.totalorder %s17, 0
      %p142 = por %p140, %p141
      %p143 = scmp.ne.s32.totalorder %s135, %s137
      %p144 = scmp.eq.s32.totalorder %s22, 1
      %p145 = por %p143, %p144
      %p146 = scmp.ne.s32.totalorder %s137, %s138
      %p147 = scmp.eq.s32.totalorder %s22, 0
      %p148 = por %p146, %p147
      %p149 = scmp.ne.s32.totalorder %s137, %s138
      %p150 = scmp.eq.s32.totalorder %s23, 1
      %p151 = por %p149, %p150
      %p153 = scmp.ne.s32.totalorder %s138, %s152
      %p154 = scmp.eq.s32.totalorder %s23, 0
      %p155 = por %p153, %p154
      %s157 = sadd.s32 %s156, 1
      %p160 = scmp.eq.s32.totalorder %s17, 1
      %p161 = scmp.ne.s32.totalorder %s156, %s158
      %p162 = scmp.eq.s32.totalorder %s17, 0
      %p163 = por %p161, %p162
      %p164 = scmp.ne.s32.totalorder %s156, %s158
      %p165 = scmp.eq.s32.totalorder %s22, 1
      %p166 = por %p164, %p165
      %p167 = scmp.ne.s32.totalorder %s158, %s159
      %p168 = scmp.eq.s32.totalorder %s22, 0
      %p169 = por %p167, %p168
      %p170 = scmp.ne.s32.totalorder %s158, %s159
      %p171 = scmp.eq.s32.totalorder %s23, 1
      %p172 = por %p170, %p171
      %p174 = scmp.ne.s32.totalorder %s159, %s173
      %p175 = scmp.eq.s32.totalorder %s23, 0
      %p176 = por %p174, %p175
      %s178 = sadd.s32 %s177, 1
      %p181 = scmp.eq.s32.totalorder %s17, 1
      %p182 = scmp.ne.s32.totalorder %s177, %s179
      %p183 = scmp.eq.s32.totalorder %s17, 0
      %p184 = por %p182, %p183
      %p185 = scmp.ne.s32.totalorder %s177, %s179
      %p186 = scmp.eq.s32.totalorder %s22, 1
      %p187 = por %p185, %p186
      %p188 = scmp.ne.s32.totalorder %s179, %s180
      %p189 = scmp.eq.s32.totalorder %s22, 0
      %p190 = por %p188, %p189
      %p191 = scmp.ne.s32.totalorder %s179, %s180
      %p192 = scmp.eq.s32.totalorder %s23, 1
      %p193 = por %p191, %p192
      %p195 = scmp.ne.s32.totalorder %s180, %s194
      %p196 = scmp.eq.s32.totalorder %s23, 0
      %p197 = por %p195, %p196
      %s198 = ssub.s32 %s17, %s24
      %p199 = scmp.eq.s32.totalorder %s198, 0
      %s201 = sadd.s32 %s200, 1
      %s202 = scalar_select %p199, %s200, %s201
      %p205 = pneg %p199
      %p206 = scmp.eq.s32.totalorder %s17, 1
      %p207 = por %p205, %p206
      %p208 = scmp.ne.s32.totalorder %s200, %s203
      %p209 = scmp.eq.s32.totalorder %s17, 0
      %p210 = por %p208, %p209
      %p211 = scmp.ne.s32.totalorder %s200, %s203
      %p212 = scmp.eq.s32.totalorder %s22, 1
      %p213 = por %p211, %p212
      %p214 = scmp.ne.s32.totalorder %s203, %s204
      %p215 = scmp.eq.s32.totalorder %s22, 0
      %p216 = por %p214, %p215
      %p217 = scmp.ne.s32.totalorder %s203, %s204
      %p218 = scmp.eq.s32.totalorder %s23, 1
      %p219 = por %p217, %p218
      %p221 = scmp.ne.s32.totalorder %s204, %s220
      %p222 = scmp.eq.s32.totalorder %s23, 0
      %p223 = por %p221, %p222
      %p224 = scmp.le.s32.totalorder 1, %s17
      %p225 = scmp.lt.s32.totalorder %s17, 3
      %p226 = pnand %p224, %p225
      %p227 = pneg %p226
      // Predicated region
      $region9: #{tpu_custom_call.1} parent=5 // pred_check
        _
      $region10: #{tpu_custom_call.1} parent=5 // pred_check_branch
        %229 = sbr.rel (%p226) target = $region12
      $region11: #{tpu_custom_call.1} parent=5 // pred_region
        %s230 = ssub.s32 %s17, 1
        // Predicated region
        $region13: #{tpu_custom_call.1} parent=11 // pred_check
          %p231 = pneg %p64
        $region14: #{tpu_custom_call.1} parent=11 // pred_check_branch
          %233 = sbr.rel (%p231) target = $region16
        $region15: #{tpu_custom_call.1} parent=11 // pred_region
          _
        $region16: #{tpu_custom_call.1} parent=11 // pred_fallthru
          _
        // Predicated region
        $region17: #{tpu_custom_call.1} parent=11 // pred_check
          %p234 = pneg %p85
        $region18: #{tpu_custom_call.1} parent=11 // pred_check_branch
          %236 = sbr.rel (%p234) target = $region20
        $region19: #{tpu_custom_call.1} parent=11 // pred_region
          _
        $region20: #{tpu_custom_call.1} parent=11 // pred_fallthru
          _
        // Predicated region
        $region21: #{tpu_custom_call.1} parent=11 // pred_check
          %p237 = pneg %p106
        $region22: #{tpu_custom_call.1} parent=11 // pred_check_branch
          %239 = sbr.rel (%p237) target = $region24
        $region23: #{tpu_custom_call.1} parent=11 // pred_region
          _
        $region24: #{tpu_custom_call.1} parent=11 // pred_fallthru
          _
        // Predicated region
        $region25: #{tpu_custom_call.1} parent=11 // pred_check
          %p240 = pneg %p127
        $region26: #{tpu_custom_call.1} parent=11 // pred_check_branch
          %242 = sbr.rel (%p240) target = $region28
        $region27: #{tpu_custom_call.1} parent=11 // pred_region
          _
        $region28: #{tpu_custom_call.1} parent=11 // pred_fallthru
          _
        // Predicated region
        $region29: #{tpu_custom_call.1} parent=11 // pred_check
          %p243 = pneg %p148
        $region30: #{tpu_custom_call.1} parent=11 // pred_check_branch
          %245 = sbr.rel (%p243) target = $region32
        $region31: #{tpu_custom_call.1} parent=11 // pred_region
          _
        $region32: #{tpu_custom_call.1} parent=11 // pred_fallthru
          _
        // Predicated region
        $region33: #{tpu_custom_call.1} parent=11 // pred_check
          %p246 = pneg %p169
        $region34: #{tpu_custom_call.1} parent=11 // pred_check_branch
          %248 = sbr.rel (%p246) target = $region36
        $region35: #{tpu_custom_call.1} parent=11 // pred_region
          _
        $region36: #{tpu_custom_call.1} parent=11 // pred_fallthru
          _
        // Predicated region
        $region37: #{tpu_custom_call.1} parent=11 // pred_check
          %p249 = pneg %p190
        $region38: #{tpu_custom_call.1} parent=11 // pred_check_branch
          %251 = sbr.rel (%p249) target = $region40
        $region39: #{tpu_custom_call.1} parent=11 // pred_region
          _
        $region40: #{tpu_custom_call.1} parent=11 // pred_fallthru
          _
      $region12: #{tpu_custom_call.1} parent=5 // pred_fallthru
        _
      %p252 = scmp.lt.s32.totalorder %s17, 2
      // Predicated region
      $region41: #{tpu_custom_call.1} parent=5 // pred_check
        %p253 = pneg %p252
      $region42: #{tpu_custom_call.1} parent=5 // pred_check_branch
        %255 = sbr.rel (%p253) target = $region44
      $region43: #{tpu_custom_call.1} parent=5 // pred_region
        // Predicated region
        $region45: #{tpu_custom_call.1} parent=43 // pred_check
          %p256 = pneg %p37
        $region46: #{tpu_custom_call.1} parent=43 // pred_check_branch
          %258 = sbr.rel (%p256) target = $region48
        $region47: #{tpu_custom_call.1} parent=43 // pred_region
          %p259 = scmp.lt.s32.totalorder %s17, 1
          %s260 = scalar_select %p259, %s17, 1
          %s261 = smul.addr %s260, 2
          %s262 = smul.addr %s261, 4
          %s263 = scalar_lea.vmem %s0, %s262
        $region48: #{tpu_custom_call.1} parent=43 // pred_fallthru
          _
      $region44: #{tpu_custom_call.1} parent=5 // pred_fallthru
        _
      %p264 = scmp.le.s32.totalorder 1, %s17
      %p265 = scmp.lt.s32.totalorder %s17, 3
      %p266 = pnand %p264, %p265
      %p267 = pneg %p266
      // Predicated region
      $region49: #{tpu_custom_call.1} parent=5 // pred_check
        _
      $region50: #{tpu_custom_call.1} parent=5 // pred_check_branch
        %269 = sbr.rel (%p266) target = $region52
      $region51: #{tpu_custom_call.1} parent=5 // pred_region
        %s270 = ssub.s32 %s17, 1
        %p271 = scmp.lt.s32.totalorder %s22, 1
        %s272 = scalar_select %p271, %s22, 1
        %s273 = smul.addr %s272, 2
        %s274 = smul.addr %s273, 4
        %s275 = scalar_lea.vmem %s0, %s274
        %p276 = pneg %p43
        %p277 = pneg %p40
        %p278 = pneg %p64
        %p279 = pneg %p61
        %p280 = pneg %p85
        %p281 = pneg %p82
        %p282 = pneg %p106
        %p283 = pneg %p103
        %p284 = pneg %p127
        %p285 = pneg %p124
        %p286 = pneg %p148
        %p287 = pneg %p145
        %p288 = pneg %p169
        %p289 = pneg %p166
        %p290 = pneg %p190
        %p291 = pneg %p187
        %p292 = pneg %p216
        %p293 = pneg %p213
        %s294 = sand.u32 %s203, 1
        %s295 = scalar_lea.sflag [#allocation3], %s294
        %s296 = sand.u32 %s203, 1
        %s297 = smul.addr %s296, 48
        %s298 = scalar_lea.vmem [#allocation2], %s297
        %p299 = scmp.lt.s32.totalorder %s22, 1
        %s300 = scalar_select %p299, %s22, 1
        %s301 = smul.addr %s300, 2
        %s302 = smul.addr %s301, 4
        %s303 = scalar_lea.vmem %s0, %s302
        %v304 = vld [vmem:[%s303] sm:$0xff]
        %306 = vst [vmem:[#allocation1] ss:$2 sm:$0xff] %v304
        %v307 = vld.sshfl [vmem:[#allocation1] sm:$0xff pattern:$0x75316420]
        %v308 = vld.sshfl [vmem:[#allocation1 + $0x8] sm:$0xff pattern:$0x75316420]
        %311 = vrot.lane.b32.xlu0 %v307, 17
        %v312 = vpop.permute.xlu0 %311
        %313 = vrot.lane.b32.xlu0 %v308, 17
        %v314 = vpop.permute.xlu0 %313
        %v315 = vlaneseq
        %v316 = vand.u32 %v315, 127
        %vm317 = vcmp.lt.s32.totalorder %v316, 17
        %v318 = vsel %vm317, %v312, %v314
        %v319 = vsel %vm317, %v314, %v312
        %v320 = vld [vmem:[%s1] ss:$8 sm:$0x3]
        %v322 = vperm.slane %v320, 0
        %v323 = vperm.slane %v320, 1
        %v326 = vmul.f32 %v319, %v322
        %v327 = vmul.f32 %v318, %v323
        %v328 = vld [vmem:[%s2] sm:$0xff]
        %330 = vset.pattern.permute.xlu0 0
        %331 = vperm.xlu0 %330, %v328
        %v332 = vpop.permute.xlu0 %331
        %v334 = vperm.slane %v326, 0
        %v335 = vperm.slane %v327, 0
        %v336 = vmul.f32 %v332, %v334
        %v337 = vmul.f32 %v332, %v335
        %v338 = vadd.f32 %v336, 0.0
        %v339 = vadd.f32 %v337, 0.0
        %340 = vset.pattern.permute.xlu0 1
        %341 = vperm.xlu0 %340, %v328
        %v342 = vpop.permute.xlu0 %341
        %v344 = vperm.slane %v326, 1
        %v345 = vperm.slane %v327, 1
        %v346 = vmul.f32 %v342, %v344
        %v347 = vmul.f32 %v342, %v345
        %v348 = vadd.f32 %v338, %v346
        %v349 = vadd.f32 %v339, %v347
        %350 = vset.pattern.permute.xlu0 2
        %351 = vperm.xlu0 %350, %v328
        %v352 = vpop.permute.xlu0 %351
        %v354 = vperm.slane %v326, 2
        %v355 = vperm.slane %v327, 2
        %v356 = vmul.f32 %v352, %v354
        %v357 = vmul.f32 %v352, %v355
        %v358 = vadd.f32 %v348, %v356
        %v359 = vadd.f32 %v349, %v357
        %360 = vset.pattern.permute.xlu0 3
        %361 = vperm.xlu0 %360, %v328
        %v362 = vpop.permute.xlu0 %361
        %v364 = vperm.slane %v326, 3
        %v365 = vperm.slane %v327, 3
        %v366 = vmul.f32 %v362, %v364
        %v367 = vmul.f32 %v362, %v365
        %v368 = vadd.f32 %v358, %v366
        %v369 = vadd.f32 %v359, %v367
        %370 = vst [vmem:[#allocation1] ss:$2 sm:$0xff] %v304
        %v371 = vld.sshfl [vmem:[#allocation1] sm:$0xff pattern:$0x75316420]
        %v372 = vld.sshfl [vmem:[#allocation1 + $0x8] sm:$0xff pattern:$0x75316420]
        %375 = vrot.lane.b32.xlu0 %v371, 16
        %v376 = vpop.permute.xlu0 %375
        %377 = vrot.lane.b32.xlu0 %v372, 16
        %v378 = vpop.permute.xlu0 %377
        %vm379 = vcmp.lt.s32.totalorder %v316, 16
        %v380 = vsel %vm379, %v376, %v378
        %v381 = vsel %vm379, %v378, %v376
        %s382 = scalar_lea.vmem %s1, 1
        %v383 = vld [vmem:[%s382] ss:$8 sm:$0x3]
        %v385 = vperm.slane %v383, 0
        %v386 = vperm.slane %v383, 1
        %v389 = vmul.f32 %v381, %v385
        %v390 = vmul.f32 %v380, %v386
        %v391 = vld [vmem:[%s2] sm:$0xff]
        %393 = vset.pattern.permute.xlu0 4
        %394 = vperm.xlu0 %393, %v391
        %v395 = vpop.permute.xlu0 %394
        %v397 = vperm.slane %v389, 0
        %v398 = vperm.slane %v390, 0
        %v399 = vmul.f32 %v395, %v397
        %v400 = vmul.f32 %v395, %v398
        %v401 = vadd.f32 %v368, %v399
        %v402 = vadd.f32 %v369, %v400
        %403 = vset.pattern.permute.xlu0 5
        %404 = vperm.xlu0 %403, %v391
        %v405 = vpop.permute.xlu0 %404
        %v407 = vperm.slane %v389, 1
        %v408 = vperm.slane %v390, 1
        %v409 = vmul.f32 %v405, %v407
        %v410 = vmul.f32 %v405, %v408
        %v411 = vadd.f32 %v401, %v409
        %v412 = vadd.f32 %v402, %v410
        %413 = vset.pattern.permute.xlu0 6
        %414 = vperm.xlu0 %413, %v391
        %v415 = vpop.permute.xlu0 %414
        %v417 = vperm.slane %v389, 2
        %v418 = vperm.slane %v390, 2
        %v419 = vmul.f32 %v415, %v417
        %v420 = vmul.f32 %v415, %v418
        %v421 = vadd.f32 %v411, %v419
        %v422 = vadd.f32 %v412, %v420
        %423 = vset.pattern.permute.xlu0 7
        %424 = vperm.xlu0 %423, %v391
        %v425 = vpop.permute.xlu0 %424
        %v427 = vperm.slane %v389, 3
        %v428 = vperm.slane %v390, 3
        %v429 = vmul.f32 %v425, %v427
        %v430 = vmul.f32 %v425, %v428
        %v431 = vadd.f32 %v421, %v429
        %v432 = vadd.f32 %v422, %v430
        %433 = vst [vmem:[#allocation1] ss:$2 sm:$0xff] %v304
        %v434 = vld.sshfl [vmem:[#allocation1] sm:$0xff pattern:$0x75316420]
        %v435 = vld.sshfl [vmem:[#allocation1 + $0x8] sm:$0xff pattern:$0x75316420]
        %438 = vrot.lane.b32.xlu0 %v434, 15
        %v439 = vpop.permute.xlu0 %438
        %440 = vrot.lane.b32.xlu0 %v435, 15
        %v441 = vpop.permute.xlu0 %440
        %vm442 = vcmp.lt.s32.totalorder %v316, 15
        %v443 = vsel %vm442, %v439, %v441
        %v444 = vsel %vm442, %v441, %v439
        %s445 = scalar_lea.vmem %s1, 2
        %v446 = vld [vmem:[%s445] ss:$8 sm:$0x3]
        %v448 = vperm.slane %v446, 0
        %v449 = vperm.slane %v446, 1
        %v452 = vmul.f32 %v444, %v448
        %v453 = vmul.f32 %v443, %v449
        %v454 = vld [vmem:[%s2] sm:$0xff]
        %456 = vset.pattern.permute.xlu0 8
        %457 = vperm.xlu0 %456, %v454
        %v458 = vpop.permute.xlu0 %457
        %v460 = vperm.slane %v452, 0
        %v461 = vperm.slane %v453, 0
        %v462 = vmul.f32 %v458, %v460
        %v463 = vmul.f32 %v458, %v461
        %v464 = vadd.f32 %v431, %v462
        %v465 = vadd.f32 %v432, %v463
        %466 = vset.pattern.permute.xlu0 9
        %467 = vperm.xlu0 %466, %v454
        %v468 = vpop.permute.xlu0 %467
        %v470 = vperm.slane %v452, 1
        %v471 = vperm.slane %v453, 1
        %v472 = vmul.f32 %v468, %v470
        %v473 = vmul.f32 %v468, %v471
        %v474 = vadd.f32 %v464, %v472
        %v475 = vadd.f32 %v465, %v473
        %476 = vset.pattern.permute.xlu0 10
        %477 = vperm.xlu0 %476, %v454
        %v478 = vpop.permute.xlu0 %477
        %v480 = vperm.slane %v452, 2
        %v481 = vperm.slane %v453, 2
        %v482 = vmul.f32 %v478, %v480
        %v483 = vmul.f32 %v478, %v481
        %v484 = vadd.f32 %v474, %v482
        %v485 = vadd.f32 %v475, %v483
        %486 = vset.pattern.permute.xlu0 11
        %487 = vperm.xlu0 %486, %v454
        %v488 = vpop.permute.xlu0 %487
        %v490 = vperm.slane %v452, 3
        %v491 = vperm.slane %v453, 3
        %v492 = vmul.f32 %v488, %v490
        %v493 = vmul.f32 %v488, %v491
        %v494 = vadd.f32 %v484, %v492
        %v495 = vadd.f32 %v485, %v493
        %496 = vst [vmem:[#allocation1] ss:$2 sm:$0xff] %v304
        %v497 = vld.sshfl [vmem:[#allocation1] sm:$0xff pattern:$0x75316420]
        %v498 = vld.sshfl [vmem:[#allocation1 + $0x8] sm:$0xff pattern:$0x75316420]
        %501 = vrot.lane.b32.xlu0 %v497, 1
        %v502 = vpop.permute.xlu0 %501
        %503 = vrot.lane.b32.xlu0 %v498, 1
        %v504 = vpop.permute.xlu0 %503
        %vm505 = vcmp.lt.s32.totalorder %v316, 1
        %v506 = vsel %vm505, %v502, %v504
        %v507 = vsel %vm505, %v504, %v502
        %s508 = scalar_lea.vmem %s1, 3
        %v509 = vld [vmem:[%s508] ss:$8 sm:$0x3]
        %v511 = vperm.slane %v509, 0
        %v512 = vperm.slane %v509, 1
        %v515 = vmul.f32 %v507, %v511
        %v516 = vmul.f32 %v506, %v512
        %v517 = vld [vmem:[%s2] sm:$0xff]
        %519 = vset.pattern.permute.xlu0 12
        %520 = vperm.xlu0 %519, %v517
        %v521 = vpop.permute.xlu0 %520
        %v523 = vperm.slane %v515, 0
        %v524 = vperm.slane %v516, 0
        %v525 = vmul.f32 %v521, %v523
        %v526 = vmul.f32 %v521, %v524
        %v527 = vadd.f32 %v494, %v525
        %v528 = vadd.f32 %v495, %v526
        %529 = vset.pattern.permute.xlu0 13
        %530 = vperm.xlu0 %529, %v517
        %v531 = vpop.permute.xlu0 %530
        %v533 = vperm.slane %v515, 1
        %v534 = vperm.slane %v516, 1
        %v535 = vmul.f32 %v531, %v533
        %v536 = vmul.f32 %v531, %v534
        %v537 = vadd.f32 %v527, %v535
        %v538 = vadd.f32 %v528, %v536
        %539 = vset.pattern.permute.xlu0 14
        %540 = vperm.xlu0 %539, %v517
        %v541 = vpop.permute.xlu0 %540
        %v543 = vperm.slane %v515, 2
        %v544 = vperm.slane %v516, 2
        %v545 = vmul.f32 %v541, %v543
        %v546 = vmul.f32 %v541, %v544
        %v547 = vadd.f32 %v537, %v545
        %v548 = vadd.f32 %v538, %v546
        %549 = vset.pattern.permute.xlu0 15
        %550 = vperm.xlu0 %549, %v517
        %v551 = vpop.permute.xlu0 %550
        %v553 = vperm.slane %v515, 3
        %v554 = vperm.slane %v516, 3
        %v555 = vmul.f32 %v551, %v553
        %v556 = vmul.f32 %v551, %v554
        %v557 = vadd.f32 %v547, %v555
        %v558 = vadd.f32 %v548, %v556
        %559 = vset.pattern.permute.xlu0 16
        %560 = vperm.xlu0 %559, %v517
        %v561 = vpop.permute.xlu0 %560
        %v563 = vperm.slane %v304, 0
        %v564 = vperm.slane %v304, 4
        %v567 = vperm.slane %v563, 0
        %v568 = vperm.slane %v564, 0
        %v569 = vmul.f32 %v561, %v567
        %v570 = vmul.f32 %v561, %v568
        %v571 = vadd.f32 %v557, %v569
        %v572 = vadd.f32 %v558, %v570
        %573 = vset.pattern.permute.xlu0 17
        %574 = vperm.xlu0 %573, %v517
        %v575 = vpop.permute.xlu0 %574
        %v577 = vperm.slane %v304, 1
        %v578 = vperm.slane %v304, 5
        %v581 = vperm.slane %v577, 1
        %v582 = vperm.slane %v578, 1
        %v583 = vmul.f32 %v575, %v581
        %v584 = vmul.f32 %v575, %v582
        %v585 = vadd.f32 %v571, %v583
        %v586 = vadd.f32 %v572, %v584
        %587 = vset.pattern.permute.xlu0 18
        %588 = vperm.xlu0 %587, %v517
        %v589 = vpop.permute.xlu0 %588
        %v591 = vperm.slane %v304, 2
        %v592 = vperm.slane %v304, 6
        %v595 = vperm.slane %v591, 2
        %v596 = vperm.slane %v592, 2
        %v597 = vmul.f32 %v589, %v595
        %v598 = vmul.f32 %v589, %v596
        %v599 = vadd.f32 %v585, %v597
        %v600 = vadd.f32 %v586, %v598
        %601 = vset.pattern.permute.xlu0 19
        %602 = vperm.xlu0 %601, %v517
        %v603 = vpop.permute.xlu0 %602
        %v605 = vperm.slane %v304, 3
        %v606 = vperm.slane %v304, 7
        %v609 = vperm.slane %v605, 3
        %v610 = vperm.slane %v606, 3
        %v611 = vmul.f32 %v603, %v609
        %v612 = vmul.f32 %v603, %v610
        %v613 = vadd.f32 %v599, %v611
        %v614 = vadd.f32 %v600, %v612
        %615 = vst [vmem:[#allocation1] ss:$2 sm:$0xff] %v304
        %v616 = vld.sshfl [vmem:[#allocation1] sm:$0xff pattern:$0x75316420]
        %v617 = vld.sshfl [vmem:[#allocation1 + $0x8] sm:$0xff pattern:$0x75316420]
        %620 = vrot.lane.b32.xlu0 %v616, 127
        %v621 = vpop.permute.xlu0 %620
        %622 = vrot.lane.b32.xlu0 %v617, 127
        %v623 = vpop.permute.xlu0 %622
        %vm624 = vcmp.lt.s32.totalorder %v316, 127
        %v625 = vsel %vm624, %v621, %v623
        %v626 = vsel %vm624, %v623, %v621
        %s627 = scalar_lea.vmem %s1, 5
        %v628 = vld [vmem:[%s627] ss:$8 sm:$0x3]
        %v630 = vperm.slane %v628, 0
        %v631 = vperm.slane %v628, 1
        %v634 = vmul.f32 %v625, %v630
        %v635 = vmul.f32 %v626, %v631
        %v636 = vld [vmem:[%s2] sm:$0xff]
        %638 = vset.pattern.permute.xlu0 20
        %639 = vperm.xlu0 %638, %v636
        %v640 = vpop.permute.xlu0 %639
        %v642 = vperm.slane %v634, 0
        %v643 = vperm.slane %v635, 0
        %v644 = vmul.f32 %v640, %v642
        %v645 = vmul.f32 %v640, %v643
        %v646 = vadd.f32 %v613, %v644
        %v647 = vadd.f32 %v614, %v645
        %648 = vset.pattern.permute.xlu0 21
        %649 = vperm.xlu0 %648, %v636
        %v650 = vpop.permute.xlu0 %649
        %v652 = vperm.slane %v634, 1
        %v653 = vperm.slane %v635, 1
        %v654 = vmul.f32 %v650, %v652
        %v655 = vmul.f32 %v650, %v653
        %v656 = vadd.f32 %v646, %v654
        %v657 = vadd.f32 %v647, %v655
        %658 = vset.pattern.permute.xlu0 22
        %659 = vperm.xlu0 %658, %v636
        %v660 = vpop.permute.xlu0 %659
        %v662 = vperm.slane %v634, 2
        %v663 = vperm.slane %v635, 2
        %v664 = vmul.f32 %v660, %v662
        %v665 = vmul.f32 %v660, %v663
        %v666 = vadd.f32 %v656, %v664
        %v667 = vadd.f32 %v657, %v665
        %668 = vset.pattern.permute.xlu0 23
        %669 = vperm.xlu0 %668, %v636
        %v670 = vpop.permute.xlu0 %669
        %v672 = vperm.slane %v634, 3
        %v673 = vperm.slane %v635, 3
        %v674 = vmul.f32 %v670, %v672
        %v675 = vmul.f32 %v670, %v673
        %v676 = vadd.f32 %v666, %v674
        %v677 = vadd.f32 %v667, %v675
        %678 = vst [vmem:[#allocation1] ss:$2 sm:$0xff] %v304
        %v679 = vld.sshfl [vmem:[#allocation1] sm:$0xff pattern:$0x75316420]
        %v680 = vld.sshfl [vmem:[#allocation1 + $0x8] sm:$0xff pattern:$0x75316420]
        %683 = vrot.lane.b32.xlu0 %v679, 113
        %v684 = vpop.permute.xlu0 %683
        %685 = vrot.lane.b32.xlu0 %v680, 113
        %v686 = vpop.permute.xlu0 %685
        %vm687 = vcmp.lt.s32.totalorder %v316, 113
        %v688 = vsel %vm687, %v684, %v686
        %v689 = vsel %vm687, %v686, %v684
        %s690 = scalar_lea.vmem %s1, 6
        %v691 = vld [vmem:[%s690] ss:$8 sm:$0x3]
        %v693 = vperm.slane %v691, 0
        %v694 = vperm.slane %v691, 1
        %v697 = vmul.f32 %v688, %v693
        %v698 = vmul.f32 %v689, %v694
        %v699 = vld [vmem:[%s2] sm:$0xff]
        %701 = vset.pattern.permute.xlu0 24
        %702 = vperm.xlu0 %701, %v699
        %v703 = vpop.permute.xlu0 %702
        %v705 = vperm.slane %v697, 0
        %v706 = vperm.slane %v698, 0
        %v707 = vmul.f32 %v703, %v705
        %v708 = vmul.f32 %v703, %v706
        %v709 = vadd.f32 %v676, %v707
        %v710 = vadd.f32 %v677, %v708
        %711 = vset.pattern.permute.xlu0 25
        %712 = vperm.xlu0 %711, %v699
        %v713 = vpop.permute.xlu0 %712
        %v715 = vperm.slane %v697, 1
        %v716 = vperm.slane %v698, 1
        %v717 = vmul.f32 %v713, %v715
        %v718 = vmul.f32 %v713, %v716
        %v719 = vadd.f32 %v709, %v717
        %v720 = vadd.f32 %v710, %v718
        %721 = vset.pattern.permute.xlu0 26
        %722 = vperm.xlu0 %721, %v699
        %v723 = vpop.permute.xlu0 %722
        %v725 = vperm.slane %v697, 2
        %v726 = vperm.slane %v698, 2
        %v727 = vmul.f32 %v723, %v725
        %v728 = vmul.f32 %v723, %v726
        %v729 = vadd.f32 %v719, %v727
        %v730 = vadd.f32 %v720, %v728
        %731 = vset.pattern.permute.xlu0 27
        %732 = vperm.xlu0 %731, %v699
        %v733 = vpop.permute.xlu0 %732
        %v735 = vperm.slane %v697, 3
        %v736 = vperm.slane %v698, 3
        %v737 = vmul.f32 %v733, %v735
        %v738 = vmul.f32 %v733, %v736
        %v739 = vadd.f32 %v729, %v737
        %v740 = vadd.f32 %v730, %v738
        %741 = vst [vmem:[#allocation1] ss:$2 sm:$0xff] %v304
        %v742 = vld.sshfl [vmem:[#allocation1] sm:$0xff pattern:$0x75316420]
        %v743 = vld.sshfl [vmem:[#allocation1 + $0x8] sm:$0xff pattern:$0x75316420]
        %746 = vrot.lane.b32.xlu0 %v742, 112
        %v747 = vpop.permute.xlu0 %746
        %748 = vrot.lane.b32.xlu0 %v743, 112
        %v749 = vpop.permute.xlu0 %748
        %vm750 = vcmp.lt.s32.totalorder %v316, 112
        %v751 = vsel %vm750, %v747, %v749
        %v752 = vsel %vm750, %v749, %v747
        %s753 = scalar_lea.vmem %s1, 7
        %v754 = vld [vmem:[%s753] ss:$8 sm:$0x3]
        %v756 = vperm.slane %v754, 0
        %v757 = vperm.slane %v754, 1
        %v760 = vmul.f32 %v751, %v756
        %v761 = vmul.f32 %v752, %v757
        %v762 = vld [vmem:[%s2] sm:$0xff]
        %764 = vset.pattern.permute.xlu0 28
        %765 = vperm.xlu0 %764, %v762
        %v766 = vpop.permute.xlu0 %765
        %v768 = vperm.slane %v760, 0
        %v769 = vperm.slane %v761, 0
        %v770 = vmul.f32 %v766, %v768
        %v771 = vmul.f32 %v766, %v769
        %v772 = vadd.f32 %v739, %v770
        %v773 = vadd.f32 %v740, %v771
        %774 = vset.pattern.permute.xlu0 29
        %775 = vperm.xlu0 %774, %v762
        %v776 = vpop.permute.xlu0 %775
        %v778 = vperm.slane %v760, 1
        %v779 = vperm.slane %v761, 1
        %v780 = vmul.f32 %v776, %v778
        %v781 = vmul.f32 %v776, %v779
        %v782 = vadd.f32 %v772, %v780
        %v783 = vadd.f32 %v773, %v781
        %784 = vset.pattern.permute.xlu0 30
        %785 = vperm.xlu0 %784, %v762
        %v786 = vpop.permute.xlu0 %785
        %v788 = vperm.slane %v760, 2
        %v789 = vperm.slane %v761, 2
        %v790 = vmul.f32 %v786, %v788
        %v791 = vmul.f32 %v786, %v789
        %v792 = vadd.f32 %v782, %v790
        %v793 = vadd.f32 %v783, %v791
        %794 = vset.pattern.permute.xlu0 31
        %795 = vperm.xlu0 %794, %v762
        %v796 = vpop.permute.xlu0 %795
        %v798 = vperm.slane %v760, 3
        %v799 = vperm.slane %v761, 3
        %v800 = vmul.f32 %v796, %v798
        %v801 = vmul.f32 %v796, %v799
        %v802 = vadd.f32 %v792, %v800
        %v803 = vadd.f32 %v793, %v801
        %804 = vst [vmem:[#allocation1] ss:$2 sm:$0xff] %v304
        %v805 = vld.sshfl [vmem:[#allocation1] sm:$0xff pattern:$0x75316420]
        %v806 = vld.sshfl [vmem:[#allocation1 + $0x8] sm:$0xff pattern:$0x75316420]
        %809 = vrot.lane.b32.xlu0 %v805, 111
        %v810 = vpop.permute.xlu0 %809
        %811 = vrot.lane.b32.xlu0 %v806, 111
        %v812 = vpop.permute.xlu0 %811
        %vm813 = vcmp.lt.s32.totalorder %v316, 111
        %v814 = vsel %vm813, %v810, %v812
        %v815 = vsel %vm813, %v812, %v810
        %s816 = scalar_lea.vmem %s1, 16
        %v817 = vld [vmem:[%s816] ss:$8 sm:$0x3]
        %v819 = vperm.slane %v817, 0
        %v820 = vperm.slane %v817, 1
        %v823 = vmul.f32 %v814, %v819
        %v824 = vmul.f32 %v815, %v820
        %v825 = vld [vmem:[%s2] sm:$0xff]
        %827 = vset.pattern.permute.xlu0 32
        %828 = vperm.xlu0 %827, %v825
        %v829 = vpop.permute.xlu0 %828
        %v831 = vperm.slane %v823, 0
        %v832 = vperm.slane %v824, 0
        %v833 = vmul.f32 %v829, %v831
        %v834 = vmul.f32 %v829, %v832
        %v835 = vadd.f32 %v802, %v833
        %v836 = vadd.f32 %v803, %v834
        %837 = vset.pattern.permute.xlu0 33
        %838 = vperm.xlu0 %837, %v825
        %v839 = vpop.permute.xlu0 %838
        %v841 = vperm.slane %v823, 1
        %v842 = vperm.slane %v824, 1
        %v843 = vmul.f32 %v839, %v841
        %v844 = vmul.f32 %v839, %v842
        %v845 = vadd.f32 %v835, %v843
        %v846 = vadd.f32 %v836, %v844
        %847 = vset.pattern.permute.xlu0 34
        %848 = vperm.xlu0 %847, %v825
        %v849 = vpop.permute.xlu0 %848
        %v851 = vperm.slane %v823, 2
        %v852 = vperm.slane %v824, 2
        %v853 = vmul.f32 %v849, %v851
        %v854 = vmul.f32 %v849, %v852
        %v855 = vadd.f32 %v845, %v853
        %v856 = vadd.f32 %v846, %v854
        %857 = vset.pattern.permute.xlu0 35
        %858 = vperm.xlu0 %857, %v825
        %v859 = vpop.permute.xlu0 %858
        %v861 = vperm.slane %v823, 3
        %v862 = vperm.slane %v824, 3
        %v863 = vmul.f32 %v859, %v861
        %v864 = vmul.f32 %v859, %v862
        %v865 = vadd.f32 %v855, %v863
        %v866 = vadd.f32 %v856, %v864
        %v867 = vld [vmem:[%s3] sm:$0xff]
        %869 = vset.pattern.permute.xlu0 0
        %870 = vperm.xlu0 %869, %v867
        %v871 = vpop.permute.xlu0 %870
        %v873 = vadd.f32 %v865, %v871
        %v874 = vadd.f32 %v866, %v871
        %v875 = vmax.f32 %v873, 0.0
        %v876 = vmax.f32 %v874, 0.0
        %v877 = vmin.f32 %v875, 6.0
        %v878 = vmin.f32 %v876, 6.0
        %v879 = vld [vmem:[%s4] sm:$0xff]
        %880 = vrot.lane.b32.xlu0 %v877, 17
        %v881 = vpop.permute.xlu0 %880
        %882 = vrot.lane.b32.xlu0 %v878, 17
        %v883 = vpop.permute.xlu0 %882
        %v884 = vsel %vm317, %v881, %v883
        %v885 = vsel %vm317, %v883, %v881
        %v886 = vmul.f32 %v885, %v322
        %v887 = vmul.f32 %v884, %v323
        %889 = vset.pattern.permute.xlu0 0
        %890 = vperm.xlu0 %889, %v879
        %v891 = vpop.permute.xlu0 %890
        %v893 = vmul.f32 %v891, %v886
        %v894 = vmul.f32 %v891, %v887
        %v895 = vadd.f32 %v893, 0.0
        %v896 = vadd.f32 %v894, 0.0
        %897 = vrot.lane.b32.xlu0 %v877, 16
        %v898 = vpop.permute.xlu0 %897
        %899 = vrot.lane.b32.xlu0 %v878, 16
        %v900 = vpop.permute.xlu0 %899
        %v901 = vsel %vm379, %v898, %v900
        %v902 = vsel %vm379, %v900, %v898
        %v903 = vmul.f32 %v902, %v385
        %v904 = vmul.f32 %v901, %v386
        %905 = vset.pattern.permute.xlu0 1
        %906 = vperm.xlu0 %905, %v879
        %v907 = vpop.permute.xlu0 %906
        %v909 = vmul.f32 %v907, %v903
        %v910 = vmul.f32 %v907, %v904
        %v911 = vadd.f32 %v895, %v909
        %v912 = vadd.f32 %v896, %v910
        %913 = vrot.lane.b32.xlu0 %v877, 15
        %v914 = vpop.permute.xlu0 %913
        %915 = vrot.lane.b32.xlu0 %v878, 15
        %v916 = vpop.permute.xlu0 %915
        %v917 = vsel %vm442, %v914, %v916
        %v918 = vsel %vm442, %v916, %v914
        %v919 = vmul.f32 %v918, %v448
        %v920 = vmul.f32 %v917, %v449
        %921 = vset.pattern.permute.xlu0 2
        %922 = vperm.xlu0 %921, %v879
        %v923 = vpop.permute.xlu0 %922
        %v925 = vmul.f32 %v923, %v919
        %v926 = vmul.f32 %v923, %v920
        %v927 = vadd.f32 %v911, %v925
        %v928 = vadd.f32 %v912, %v926
        %929 = vrot.lane.b32.xlu0 %v877, 1
        %v930 = vpop.permute.xlu0 %929
        %931 = vrot.lane.b32.xlu0 %v878, 1
        %v932 = vpop.permute.xlu0 %931
        %v933 = vsel %vm505, %v930, %v932
        %v934 = vsel %vm505, %v932, %v930
        %v935 = vmul.f32 %v934, %v511
        %v936 = vmul.f32 %v933, %v512
        %937 = vset.pattern.permute.xlu0 3
        %938 = vperm.xlu0 %937, %v879
        %v939 = vpop.permute.xlu0 %938
        %v941 = vmul.f32 %v939, %v935
        %v942 = vmul.f32 %v939, %v936
        %v943 = vadd.f32 %v927, %v941
        %v944 = vadd.f32 %v928, %v942
        %945 = vset.pattern.permute.xlu0 4
        %946 = vperm.xlu0 %945, %v879
        %v947 = vpop.permute.xlu0 %946
        %v949 = vmul.f32 %v947, %v877
        %v950 = vmul.f32 %v947, %v878
        %v951 = vadd.f32 %v943, %v949
        %v952 = vadd.f32 %v944, %v950
        %953 = vrot.lane.b32.xlu0 %v877, 127
        %v954 = vpop.permute.xlu0 %953
        %955 = vrot.lane.b32.xlu0 %v878, 127
        %v956 = vpop.permute.xlu0 %955
        %v957 = vsel %vm624, %v954, %v956
        %v958 = vsel %vm624, %v956, %v954
        %v959 = vmul.f32 %v957, %v630
        %v960 = vmul.f32 %v958, %v631
        %961 = vset.pattern.permute.xlu0 5
        %962 = vperm.xlu0 %961, %v879
        %v963 = vpop.permute.xlu0 %962
        %v965 = vmul.f32 %v963, %v959
        %v966 = vmul.f32 %v963, %v960
        %v967 = vadd.f32 %v951, %v965
        %v968 = vadd.f32 %v952, %v966
        %969 = vrot.lane.b32.xlu0 %v877, 113
        %v970 = vpop.permute.xlu0 %969
        %971 = vrot.lane.b32.xlu0 %v878, 113
        %v972 = vpop.permute.xlu0 %971
        %v973 = vsel %vm687, %v970, %v972
        %v974 = vsel %vm687, %v972, %v970
        %v975 = vmul.f32 %v973, %v693
        %v976 = vmul.f32 %v974, %v694
        %977 = vset.pattern.permute.xlu0 6
        %978 = vperm.xlu0 %977, %v879
        %v979 = vpop.permute.xlu0 %978
        %v981 = vmul.f32 %v979, %v975
        %v982 = vmul.f32 %v979, %v976
        %v983 = vadd.f32 %v967, %v981
        %v984 = vadd.f32 %v968, %v982
        %985 = vrot.lane.b32.xlu0 %v877, 112
        %v986 = vpop.permute.xlu0 %985
        %987 = vrot.lane.b32.xlu0 %v878, 112
        %v988 = vpop.permute.xlu0 %987
        %v989 = vsel %vm750, %v986, %v988
        %v990 = vsel %vm750, %v988, %v986
        %v991 = vmul.f32 %v989, %v756
        %v992 = vmul.f32 %v990, %v757
        %993 = vset.pattern.permute.xlu0 7
        %994 = vperm.xlu0 %993, %v879
        %v995 = vpop.permute.xlu0 %994
        %v997 = vmul.f32 %v995, %v991
        %v998 = vmul.f32 %v995, %v992
        %v999 = vadd.f32 %v983, %v997
        %v1000 = vadd.f32 %v984, %v998
        %1001 = vrot.lane.b32.xlu0 %v877, 111
        %v1002 = vpop.permute.xlu0 %1001
        %1003 = vrot.lane.b32.xlu0 %v878, 111
        %v1004 = vpop.permute.xlu0 %1003
        %v1005 = vsel %vm813, %v1002, %v1004
        %v1006 = vsel %vm813, %v1004, %v1002
        %v1007 = vmul.f32 %v1005, %v819
        %v1008 = vmul.f32 %v1006, %v820
        %1009 = vset.pattern.permute.xlu0 8
        %1010 = vperm.xlu0 %1009, %v879
        %v1011 = vpop.permute.xlu0 %1010
        %v1013 = vmul.f32 %v1011, %v1007
        %v1014 = vmul.f32 %v1011, %v1008
        %v1015 = vadd.f32 %v999, %v1013
        %v1016 = vadd.f32 %v1000, %v1014
        %v1017 = vld [vmem:[%s5] sm:$0xff]
        %1019 = vset.pattern.permute.xlu0 0
        %1020 = vperm.xlu0 %1019, %v1017
        %v1021 = vpop.permute.xlu0 %1020
        %v1023 = vadd.f32 %v1015, %v1021
        %v1024 = vadd.f32 %v1016, %v1021
        %v1025 = vmax.f32 %v1023, 0.0
        %v1026 = vmax.f32 %v1024, 0.0
        %v1027 = vmin.f32 %v1025, 6.0
        %v1028 = vmin.f32 %v1026, 6.0
        %v1029 = vld [vmem:[%s6] sm:$0xff]
        %v1030 = vld [vmem:[%s6 + $0x8] sm:$0xff]
        %v1031 = vld [vmem:[%s6 + $0x10] sm:$0xff]
        %1033 = vset.pattern.permute.xlu0 0
        %1034 = vperm.xlu0 %1033, %v1029
        %v1035 = vpop.permute.xlu0 %1034
        %1038 = vset.pattern.permute.xlu0 0
        %1039 = vperm.xlu0 %1038, %v1030
        %v1040 = vpop.permute.xlu0 %1039
        %1043 = vset.pattern.permute.xlu0 0
        %1044 = vperm.xlu0 %1043, %v1031
        %v1045 = vpop.permute.xlu0 %1044
        %v1047 = vperm.slane %v1027, 0
        %v1048 = vperm.slane %v1028, 0
        %v1049 = vmul.f32 %v1035, %v1047
        %v1050 = vmul.f32 %v1035, %v1048
        %v1051 = vmul.f32 %v1040, %v1047
        %v1052 = vmul.f32 %v1040, %v1048
        %v1053 = vmul.f32 %v1045, %v1047
        %v1054 = vmul.f32 %v1045, %v1048
        %v1055 = vadd.f32 %v1049, 0.0
        %v1056 = vadd.f32 %v1050, 0.0
        %v1057 = vadd.f32 %v1051, 0.0
        %v1058 = vadd.f32 %v1052, 0.0
        %v1059 = vadd.f32 %v1053, 0.0
        %v1060 = vadd.f32 %v1054, 0.0
        %1061 = vset.pattern.permute.xlu0 1
        %1062 = vperm.xlu0 %1061, %v1029
        %v1063 = vpop.permute.xlu0 %1062
        %1065 = vset.pattern.permute.xlu0 1
        %1066 = vperm.xlu0 %1065, %v1030
        %v1067 = vpop.permute.xlu0 %1066
        %1069 = vset.pattern.permute.xlu0 1
        %1070 = vperm.xlu0 %1069, %v1031
        %v1071 = vpop.permute.xlu0 %1070
        %v1073 = vperm.slane %v1027, 1
        %v1074 = vperm.slane %v1028, 1
        %v1075 = vmul.f32 %v1063, %v1073
        %v1076 = vmul.f32 %v1063, %v1074
        %v1077 = vmul.f32 %v1067, %v1073
        %v1078 = vmul.f32 %v1067, %v1074
        %v1079 = vmul.f32 %v1071, %v1073
        %v1080 = vmul.f32 %v1071, %v1074
        %v1081 = vadd.f32 %v1055, %v1075
        %v1082 = vadd.f32 %v1056, %v1076
        %v1083 = vadd.f32 %v1057, %v1077
        %v1084 = vadd.f32 %v1058, %v1078
        %v1085 = vadd.f32 %v1059, %v1079
        %v1086 = vadd.f32 %v1060, %v1080
        %1087 = vset.pattern.permute.xlu0 2
        %1088 = vperm.xlu0 %1087, %v1029
        %v1089 = vpop.permute.xlu0 %1088
        %1091 = vset.pattern.permute.xlu0 2
        %1092 = vperm.xlu0 %1091, %v1030
        %v1093 = vpop.permute.xlu0 %1092
        %1095 = vset.pattern.permute.xlu0 2
        %1096 = vperm.xlu0 %1095, %v1031
        %v1097 = vpop.permute.xlu0 %1096
        %v1099 = vperm.slane %v1027, 2
        %v1100 = vperm.slane %v1028, 2
        %v1101 = vmul.f32 %v1089, %v1099
        %v1102 = vmul.f32 %v1089, %v1100
        %v1103 = vmul.f32 %v1093, %v1099
        %v1104 = vmul.f32 %v1093, %v1100
        %v1105 = vmul.f32 %v1097, %v1099
        %v1106 = vmul.f32 %v1097, %v1100
        %v1107 = vadd.f32 %v1081, %v1101
        %v1108 = vadd.f32 %v1082, %v1102
        %v1109 = vadd.f32 %v1083, %v1103
        %v1110 = vadd.f32 %v1084, %v1104
        %v1111 = vadd.f32 %v1085, %v1105
        %v1112 = vadd.f32 %v1086, %v1106
        %1113 = vset.pattern.permute.xlu0 3
        %1114 = vperm.xlu0 %1113, %v1029
        %v1115 = vpop.permute.xlu0 %1114
        %1117 = vset.pattern.permute.xlu0 3
        %1118 = vperm.xlu0 %1117, %v1030
        %v1119 = vpop.permute.xlu0 %1118
        %1121 = vset.pattern.permute.xlu0 3
        %1122 = vperm.xlu0 %1121, %v1031
        %v1123 = vpop.permute.xlu0 %1122
        %v1125 = vperm.slane %v1027, 3
        %v1126 = vperm.slane %v1028, 3
        %v1127 = vmul.f32 %v1115, %v1125
        %v1128 = vmul.f32 %v1115, %v1126
        %v1129 = vmul.f32 %v1119, %v1125
        %v1130 = vmul.f32 %v1119, %v1126
        %v1131 = vmul.f32 %v1123, %v1125
        %v1132 = vmul.f32 %v1123, %v1126
        %v1133 = vadd.f32 %v1107, %v1127
        %v1134 = vadd.f32 %v1108, %v1128
        %v1135 = vadd.f32 %v1109, %v1129
        %v1136 = vadd.f32 %v1110, %v1130
        %v1137 = vadd.f32 %v1111, %v1131
        %v1138 = vadd.f32 %v1112, %v1132
        %1139 = vset.pattern.permute.xlu0 4
        %1140 = vperm.xlu0 %1139, %v1029
        %v1141 = vpop.permute.xlu0 %1140
        %1143 = vset.pattern.permute.xlu0 4
        %1144 = vperm.xlu0 %1143, %v1030
        %v1145 = vpop.permute.xlu0 %1144
        %1147 = vset.pattern.permute.xlu0 4
        %1148 = vperm.xlu0 %1147, %v1031
        %v1149 = vpop.permute.xlu0 %1148
        %v1151 = vperm.slane %v1027, 4
        %v1152 = vperm.slane %v1028, 4
        %v1153 = vmul.f32 %v1141, %v1151
        %v1154 = vmul.f32 %v1141, %v1152
        %v1155 = vmul.f32 %v1145, %v1151
        %v1156 = vmul.f32 %v1145, %v1152
        %v1157 = vmul.f32 %v1149, %v1151
        %v1158 = vmul.f32 %v1149, %v1152
        %v1159 = vadd.f32 %v1133, %v1153
        %v1160 = vadd.f32 %v1134, %v1154
        %v1161 = vadd.f32 %v1135, %v1155
        %v1162 = vadd.f32 %v1136, %v1156
        %v1163 = vadd.f32 %v1137, %v1157
        %v1164 = vadd.f32 %v1138, %v1158
        %1165 = vset.pattern.permute.xlu0 5
        %1166 = vperm.xlu0 %1165, %v1029
        %v1167 = vpop.permute.xlu0 %1166
        %1169 = vset.pattern.permute.xlu0 5
        %1170 = vperm.xlu0 %1169, %v1030
        %v1171 = vpop.permute.xlu0 %1170
        %1173 = vset.pattern.permute.xlu0 5
        %1174 = vperm.xlu0 %1173, %v1031
        %v1175 = vpop.permute.xlu0 %1174
        %v1177 = vperm.slane %v1027, 5
        %v1178 = vperm.slane %v1028, 5
        %v1179 = vmul.f32 %v1167, %v1177
        %v1180 = vmul.f32 %v1167, %v1178
        %v1181 = vmul.f32 %v1171, %v1177
        %v1182 = vmul.f32 %v1171, %v1178
        %v1183 = vmul.f32 %v1175, %v1177
        %v1184 = vmul.f32 %v1175, %v1178
        %v1185 = vadd.f32 %v1159, %v1179
        %v1186 = vadd.f32 %v1160, %v1180
        %v1187 = vadd.f32 %v1161, %v1181
        %v1188 = vadd.f32 %v1162, %v1182
        %v1189 = vadd.f32 %v1163, %v1183
        %v1190 = vadd.f32 %v1164, %v1184
        %1191 = vset.pattern.permute.xlu0 6
        %1192 = vperm.xlu0 %1191, %v1029
        %v1193 = vpop.permute.xlu0 %1192
        %1195 = vset.pattern.permute.xlu0 6
        %1196 = vperm.xlu0 %1195, %v1030
        %v1197 = vpop.permute.xlu0 %1196
        %1199 = vset.pattern.permute.xlu0 6
        %1200 = vperm.xlu0 %1199, %v1031
        %v1201 = vpop.permute.xlu0 %1200
        %v1203 = vperm.slane %v1027, 6
        %v1204 = vperm.slane %v1028, 6
        %v1205 = vmul.f32 %v1193, %v1203
        %v1206 = vmul.f32 %v1193, %v1204
        %v1207 = vmul.f32 %v1197, %v1203
        %v1208 = vmul.f32 %v1197, %v1204
        %v1209 = vmul.f32 %v1201, %v1203
        %v1210 = vmul.f32 %v1201, %v1204
        %v1211 = vadd.f32 %v1185, %v1205
        %v1212 = vadd.f32 %v1186, %v1206
        %v1213 = vadd.f32 %v1187, %v1207
        %v1214 = vadd.f32 %v1188, %v1208
        %v1215 = vadd.f32 %v1189, %v1209
        %v1216 = vadd.f32 %v1190, %v1210
        %1217 = vset.pattern.permute.xlu0 7
        %1218 = vperm.xlu0 %1217, %v1029
        %v1219 = vpop.permute.xlu0 %1218
        %1221 = vset.pattern.permute.xlu0 7
        %1222 = vperm.xlu0 %1221, %v1030
        %v1223 = vpop.permute.xlu0 %1222
        %1225 = vset.pattern.permute.xlu0 7
        %1226 = vperm.xlu0 %1225, %v1031
        %v1227 = vpop.permute.xlu0 %1226
        %v1229 = vperm.slane %v1027, 7
        %v1230 = vperm.slane %v1028, 7
        %v1231 = vmul.f32 %v1219, %v1229
        %v1232 = vmul.f32 %v1219, %v1230
        %v1233 = vmul.f32 %v1223, %v1229
        %v1234 = vmul.f32 %v1223, %v1230
        %v1235 = vmul.f32 %v1227, %v1229
        %v1236 = vmul.f32 %v1227, %v1230
        %v1237 = vadd.f32 %v1211, %v1231
        %v1238 = vadd.f32 %v1212, %v1232
        %v1239 = vadd.f32 %v1213, %v1233
        %v1240 = vadd.f32 %v1214, %v1234
        %v1241 = vadd.f32 %v1215, %v1235
        %v1242 = vadd.f32 %v1216, %v1236
        %v1243 = vld [vmem:[%s7] sm:$0xff]
        %v1244 = vld [vmem:[%s7 + $0x8] sm:$0xff]
        %v1245 = vld [vmem:[%s7 + $0x10] sm:$0xff]
        %1247 = vset.pattern.permute.xlu0 0
        %1248 = vperm.xlu0 %1247, %v1243
        %v1249 = vpop.permute.xlu0 %1248
        %1252 = vset.pattern.permute.xlu0 0
        %1253 = vperm.xlu0 %1252, %v1244
        %v1254 = vpop.permute.xlu0 %1253
        %1257 = vset.pattern.permute.xlu0 0
        %1258 = vperm.xlu0 %1257, %v1245
        %v1259 = vpop.permute.xlu0 %1258
        %v1261 = vadd.f32 %v1237, %v1249
        %v1262 = vadd.f32 %v1238, %v1249
        %v1263 = vadd.f32 %v1239, %v1254
        %v1264 = vadd.f32 %v1240, %v1254
        %v1265 = vadd.f32 %v1241, %v1259
        %v1266 = vadd.f32 %v1242, %v1259
        %1267 = vst [vmem:[%s298] sm:$0xff] %v1261
        %1268 = vst [vmem:[%s298 + $0x8] sm:$0xff] %v1262
        %1269 = vst [vmem:[%s298 + $0x10] sm:$0xff] %v1263
        %1270 = vst [vmem:[%s298 + $0x18] sm:$0xff] %v1264
        %1271 = vst [vmem:[%s298 + $0x20] sm:$0xff] %v1265
        %1272 = vst [vmem:[%s298 + $0x28] sm:$0xff] %v1266
        %s1273 = sand.u32 %s203, 1
        %s1274 = scalar_lea.sflag [#allocation3], %s1273
        %s1275 = sand.u32 %s203, 1
        %s1276 = smul.addr %s1275, 48
        %s1277 = scalar_lea.vmem [#allocation2], %s1276
        // Predicated region
        $region53: #{tpu_custom_call.1} parent=51 // pred_check
          %p1278 = pneg %p213
        $region54: #{tpu_custom_call.1} parent=51 // pred_check_branch
          %1280 = sbr.rel (%p1278) target = $region56
        $region55: #{tpu_custom_call.1} parent=51 // pred_region
          %1282 = vsyncadd %s1274, 0
          %s1283 = smul.addr %s22, 6
          %s1284 = smul.addr %s1283, 8
          %s1285 = scalar_lea.hbm %s8, %s1284
          %s1286 = sshll.u32 %s1277, 4
          %s1287 = int_to_ptr.vmem [resolvable:$true] %s1286
          %s1288 = sshll.u32 %s1285, 4
          %s1289 = int_to_ptr.hbm [resolvable:$true] %s1288
          %1294 = dma.vmem_to_hbm [thread:$0]  %s1287, 768, %s1289, %s1274, 256, 256, 16
        $region56: #{tpu_custom_call.1} parent=51 // pred_fallthru
          _
      $region52: #{tpu_custom_call.1} parent=5 // pred_fallthru
        _
      %p1295 = scmp.le.s32.totalorder 2, %s17
      // Predicated region
      $region57: #{tpu_custom_call.1} parent=5 // pred_check
        %p1296 = pneg %p1295
      $region58: #{tpu_custom_call.1} parent=5 // pred_check_branch
        %1298 = sbr.rel (%p1296) target = $region60
      $region59: #{tpu_custom_call.1} parent=5 // pred_region
        %s1299 = ssub.s32 %s17, 2
        // Predicated region
        $region61: #{tpu_custom_call.1} parent=59 // pred_check
          %p1300 = pneg %p219
        $region62: #{tpu_custom_call.1} parent=59 // pred_check_branch
          %1302 = sbr.rel (%p1300) target = $region64
        $region63: #{tpu_custom_call.1} parent=59 // pred_region
          %s1303 = sand.u32 %s204, 1
          %s1304 = scalar_lea.sflag [#allocation3], %s1303
          %s1305 = sand.u32 %s204, 1
          %s1306 = smul.addr %s1305, 48
          %s1307 = scalar_lea.vmem [#allocation2], %s1306
          %1309 = dma.done %s1304, 768
        $region64: #{tpu_custom_call.1} parent=59 // pred_fallthru
          _
      $region60: #{tpu_custom_call.1} parent=5 // pred_fallthru
        _
    $region6: #{tpu_custom_call.1} parent=1 // loop_footer
      %s21 = sadd.s32 1, %s17
    $region7: #{tpu_custom_call.1} parent=1 // loop_footer_branch
      %16 = sbr.rel target = $region3
    $region8: #{tpu_custom_call.1} parent=1 // loop_exit
      _
    %1310 = vsyncpa [#allocation3], 1
    %s1311 = scalar_lea.sflag [#allocation3], 1
    %1312 = vsyncpa %s1311, 1

</llo_original>
